<compile_context>
chip_gen: v5e
topology: v5e:2x2
jax: 0.10.0
libtpu: 0.0.40
codegen_flags: <defaults>
</compile_context>

<pallas_src>
from functools import partial

import jax
import jax.numpy as jnp
from jax import lax
from jax.experimental import pallas as pl
from jax.experimental.pallas import tpu as pltpu


def _cross_attn_kernel(x1_ref, x2_ref, x3_ref,
                       wq_ref, wk_ref, wv_ref, wp_ref, bp_ref,
                       o_ref, ctx_ref, *, scale, num_heads, n_valid):
    TB, N, C = x1_ref.shape
    D = C // num_heads
    M = TB * N

    # A @ B.T via dimension_numbers (no explicit transpose anywhere).
    dn = (((1,), (1,)), ((), ()))

    # Flatten batch*tokens (wrapper pads N to a sublane multiple -> view) and
    # feed the MXU bf16 with a tall M and full C width (lane-dense).
    x1 = x1_ref[...].reshape(M, C).astype(jnp.bfloat16)
    x2 = x2_ref[...].reshape(M, C).astype(jnp.bfloat16)
    x3 = x3_ref[...].reshape(M, C).astype(jnp.bfloat16)

    wq = wq_ref[...]          # (C, C) bf16, torch (out, in) convention
    wk = wk_ref[...]
    wv = wv_ref[...]
    wp = wp_ref[...]

    # Full-width projections, once per batch tile (hoisted out of the head loop).
    q = lax.dot_general(x1, wq, dn, preferred_element_type=jnp.float32)   # (M, C)
    k = lax.dot_general(x2, wk, dn, preferred_element_type=jnp.float32)   # (M, C)
    v = lax.dot_general(x3, wv, dn, preferred_element_type=jnp.float32)   # (M, C)

    # Fold 1/sqrt(D) into q (M*C multiplies instead of N*N per head).
    # Reshape while still f32 (sublane=8) so it stays a view, then cast.
    q = (q * scale).reshape(TB, N, C).astype(jnp.bfloat16)
    k = k.reshape(TB, N, C).astype(jnp.bfloat16)
    v = v.reshape(TB, N, C).astype(jnp.bfloat16)

    if n_valid < N:   # wrapper padded the token axis: mask padded keys.
        key_mask = lax.broadcasted_iota(jnp.int32, (1, 1, N), 2) >= n_valid
    else:
        key_mask = None

    # Per-head attention (num_heads is small -> static unroll).
    for h in range(num_heads):
        lo, hi = h * D, (h + 1) * D
        qh = q[:, :, lo:hi]                                               # (TB, N, D)
        kh = k[:, :, lo:hi]
        vh = v[:, :, lo:hi]

        s = jnp.einsum('bqd,bkd->bqk', qh, kh,
                       preferred_element_type=jnp.float32)                # (TB, N, N)
        if key_mask is not None:
            s = jnp.where(key_mask, -1e30, s)

        # Numerically-stable softmax over keys (f32 on VPU/EUP).
        s = s - jnp.max(s, axis=-1, keepdims=True)
        p = jnp.exp(s)
        p = p * pl.reciprocal(jnp.sum(p, axis=-1, keepdims=True), approx=True)
        # TODO(synk): attn_drop / proj_drop are identity (p=0.0 / eval); no dropout RNG.

        ctx_ref[:, :, lo:hi] = jnp.einsum('bqk,bkd->bqd', p.astype(jnp.bfloat16), vh,
                                          preferred_element_type=jnp.float32)

    # Single full-depth output projection (contracting C) + bias, straight to o_ref.
    ctx = ctx_ref[...].reshape(M, C).astype(jnp.bfloat16)
    y = lax.dot_general(ctx, wp, dn, preferred_element_type=jnp.float32)  # (M, C)
    y = y + bp_ref[...]                                                   # (1, C) broadcast
    o_ref[...] = y.reshape(TB, N, C).astype(o_ref.dtype)


def _round_up(x, m):
    return -(-x // m) * m


def _pick_batch_tile(B, N, C, vmem_cap, target_rows=1024):
    """Largest divisor of B that (a) gives ~target_rows MXU rows per tile,
    (b) fits the per-tile working set in a fraction of VMEM, and
    (c) keeps >= 2 batch tiles when B >= 2 so the v7x megacore has work for
    both TensorCores."""
    per_elem = N * C * 28 + N * N * 8            # rough per-batch-element VMEM bytes
    budget = max(1 << 20, vmem_cap // 3)
    cap = max(1, budget // per_elem)
    want = max(1, -(-target_rows // N))          # ceil(target_rows / N)
    want = min(B, want, cap)
    if B >= 2:
        want = max(1, min(want, B // 2))
    for tb in range(want, 0, -1):
        if B % tb == 0:
            return tb
    return 1


def cross_attention(x1, x2, x3, params, *, num_heads):
    """params: torch-convention weights:
         wq, wk, wv, wp : (C, C)  (out_features, in_features)
         bp             : (C,)
    """
    B, N, C = x1.shape
    assert C % num_heads == 0, "num_heads must divide C"
    D = C // num_heads
    scale = D ** (-0.5)

    # Pad tokens to a sublane multiple so in-kernel reshapes are views; padded
    # keys are masked in-kernel, padded query rows are sliced off below.
    SUB = 8
    Np = _round_up(N, SUB)
    if Np != N:
        pad = ((0, 0), (0, Np - N), (0, 0))
        x1p, x2p, x3p = (jnp.pad(a, pad) for a in (x1, x2, x3))
    else:
        x1p, x2p, x3p = x1, x2, x3

    # Full (C, C) bf16 weights, DMA'd once for the whole grid (constant index_map).
    wq = params["wq"].astype(jnp.bfloat16)
    wk = params["wk"].astype(jnp.bfloat16)
    wv = params["wv"].astype(jnp.bfloat16)
    wp = params["wp"].astype(jnp.bfloat16)
    bp = params["bp"].reshape(1, C).astype(jnp.float32)

    # Generation-aware VMEM budget (v5e/v6e: 128 MiB, v7x: 64 MiB per TensorCore).
    try:
        vmem_cap = int(getattr(pltpu.get_tpu_info(), "vmem_capacity_bytes", 64 << 20))
    except Exception:
        vmem_cap = 64 << 20

    TB = _pick_batch_tile(B, Np, C, vmem_cap)
    n_bt = B // TB

    itemsize = x1.dtype.itemsize
    blk = TB * Np * C * itemsize
    est = (3 * 2 + 2) * blk                      # double-buffered inputs + output blocks
    est += 2 * (4 * C * C * 2 + C * 4)           # resident bf16 weights + bias
    est += TB * (Np * C * 28 + Np * Np * 8)      # q/k/v/ctx/score intermediates
    vmem_limit = int(min(max(est * 3 // 2, 32 << 20),
                         max(32 << 20, vmem_cap * 3 // 4)))

    kernel = partial(_cross_attn_kernel, scale=scale, num_heads=num_heads, n_valid=N)

    x_spec = pl.BlockSpec((TB, Np, C), lambda b: (b, 0, 0))
    w_spec = pl.BlockSpec((C, C), lambda b: (0, 0))
    b_spec = pl.BlockSpec((1, C), lambda b: (0, 0))

    out = pl.pallas_call(
        kernel,
        out_shape=jax.ShapeDtypeStruct((B, Np, C), x1.dtype),
        grid_spec=pltpu.PrefetchScalarGridSpec(
            num_scalar_prefetch=0,
            grid=(n_bt,),
            in_specs=[x_spec, x_spec, x_spec,
                      w_spec, w_spec, w_spec, w_spec, b_spec],
            out_specs=pl.BlockSpec((TB, Np, C), lambda b: (b, 0, 0)),
            scratch_shapes=[pltpu.VMEM((TB, Np, C), jnp.float32)],  # per-head ctx columns
        ),
        compiler_params=pltpu.CompilerParams(
            dimension_semantics=("parallel",),
            vmem_limit_bytes=vmem_limit,
        ),
    )(x1p, x2p, x3p, wq, wk, wv, wp, bp)

    return out[:, :N, :] if Np != N else out


def _reference(x1, x2, x3, params, *, num_heads):
    """Pure-JAX (f32) reference mirroring the PyTorch forward exactly."""
    B, N, C = x1.shape
    D = C // num_heads
    scale = D ** (-0.5)
    q = x1 @ params["wq"].T
    k = x2 @ params["wk"].T
    v = x3 @ params["wv"].T
    q = q.reshape(B, N, num_heads, D).transpose(0, 2, 1, 3)
    k = k.reshape(B, N, num_heads, D).transpose(0, 2, 1, 3)
    v = v.reshape(B, N, num_heads, D).transpose(0, 2, 1, 3)
    attn = jnp.einsum("bhqd,bhkd->bhqk", q, k) * scale
    attn = jax.nn.softmax(attn, axis=-1)
    out = jnp.einsum("bhqk,bhkd->bhqd", attn, v)
    out = out.transpose(0, 2, 1, 3).reshape(B, N, C)
    return out @ params["wp"].T + params["bp"]


if __name__ == "__main__":
    B, N, C = 2, 8, 32
    num_heads = 8

    key = jax.random.PRNGKey(0)
    k_x1, k_x2, k_x3, k_wq, k_wk, k_wv, k_wp, k_bp = jax.random.split(key, 8)

    x1 = jax.random.normal(k_x1, (B, N, C), dtype=jnp.float32)
    x2 = jax.random.normal(k_x2, (B, N, C), dtype=jnp.float32)
    x3 = jax.random.normal(k_x3, (B, N, C), dtype=jnp.float32)

    params = {
        "wq": 0.05 * jax.random.normal(k_wq, (C, C), dtype=jnp.float32),
        "wk": 0.05 * jax.random.normal(k_wk, (C, C), dtype=jnp.float32),
        "wv": 0.05 * jax.random.normal(k_wv, (C, C), dtype=jnp.float32),
        "wp": 0.05 * jax.random.normal(k_wp, (C, C), dtype=jnp.float32),
        "bp": 0.01 * jax.random.normal(k_bp, (C,), dtype=jnp.float32),
    }

    out = cross_attention(x1, x2, x3, params, num_heads=num_heads)
    out = jax.block_until_ready(out)

    ref = _reference(x1, x2, x3, params, num_heads=num_heads)
    assert out.shape == (B, N, C)
    # bf16 MXU inputs + approx reciprocal => relaxed tolerance vs the f32 reference.
    assert jnp.allclose(out, ref, atol=2e-2, rtol=2e-2), float(jnp.max(jnp.abs(out - ref)))

    print("KERNEL_OK")
</pallas_src>

<mosaic_0001>
module attributes {stable_mosaic.version = 11 : i64} {
  func.func @_cross_attn_kernel(%arg0: i32, %arg1: memref<1x8x32xf32, #tpu.memory_space<vmem>>, %arg2: memref<1x8x32xf32, #tpu.memory_space<vmem>>, %arg3: memref<1x8x32xf32, #tpu.memory_space<vmem>>, %arg4: memref<32x32xbf16, #tpu.memory_space<vmem>>, %arg5: memref<32x32xbf16, #tpu.memory_space<vmem>>, %arg6: memref<32x32xbf16, #tpu.memory_space<vmem>>, %arg7: memref<32x32xbf16, #tpu.memory_space<vmem>>, %arg8: memref<1x32xf32, #tpu.memory_space<vmem>>, %arg9: memref<1x8x32xf32, #tpu.memory_space<vmem>>, %arg10: memref<1x8x32xf32, #tpu.memory_space<vmem>>) attributes {dimension_semantics = [#tpu.dimension_semantics<parallel>], iteration_bounds = array<i64: 2>, scalar_prefetch = 0 : i64, scratch_operands = 1 : i64, tpu.core_type = #tpu.core_type<tc>, window_params = [{transform_indices = @transform_0, window_bounds = array<i64: 1, 8, 32>}, {transform_indices = @transform_1, window_bounds = array<i64: 1, 8, 32>}, {transform_indices = @transform_2, window_bounds = array<i64: 1, 8, 32>}, {pipeline_mode = #tpu.pipeline_mode<synchronous>, transform_indices = @transform_3, window_bounds = array<i64: 32, 32>}, {pipeline_mode = #tpu.pipeline_mode<synchronous>, transform_indices = @transform_4, window_bounds = array<i64: 32, 32>}, {pipeline_mode = #tpu.pipeline_mode<synchronous>, transform_indices = @transform_5, window_bounds = array<i64: 32, 32>}, {pipeline_mode = #tpu.pipeline_mode<synchronous>, transform_indices = @transform_6, window_bounds = array<i64: 32, 32>}, {pipeline_mode = #tpu.pipeline_mode<synchronous>, transform_indices = @transform_7, window_bounds = array<i64: 1, 32>}, {transform_indices = @transform_8, window_bounds = array<i64: 1, 8, 32>}]} {
    %c0 = arith.constant 0 : index
    %c0_0 = arith.constant 0 : index
    %c0_1 = arith.constant 0 : index
    %0 = vector.load %arg1[%c0, %c0_0, %c0_1] : memref<1x8x32xf32, #tpu.memory_space<vmem>>, vector<1x8x32xf32>
    %1 = vector.shape_cast %0 : vector<1x8x32xf32> to vector<8x32xf32>
    %2 = arith.truncf %1 : vector<8x32xf32> to vector<8x32xbf16>
    %c0_2 = arith.constant 0 : index
    %c0_3 = arith.constant 0 : index
    %c0_4 = arith.constant 0 : index
    %3 = vector.load %arg2[%c0_2, %c0_3, %c0_4] : memref<1x8x32xf32, #tpu.memory_space<vmem>>, vector<1x8x32xf32>
    %4 = vector.shape_cast %3 : vector<1x8x32xf32> to vector<8x32xf32>
    %5 = arith.truncf %4 : vector<8x32xf32> to vector<8x32xbf16>
    %c0_5 = arith.constant 0 : index
    %c0_6 = arith.constant 0 : index
    %c0_7 = arith.constant 0 : index
    %6 = vector.load %arg3[%c0_5, %c0_6, %c0_7] : memref<1x8x32xf32, #tpu.memory_space<vmem>>, vector<1x8x32xf32>
    %7 = vector.shape_cast %6 : vector<1x8x32xf32> to vector<8x32xf32>
    %8 = arith.truncf %7 : vector<8x32xf32> to vector<8x32xbf16>
    %c0_8 = arith.constant 0 : index
    %c0_9 = arith.constant 0 : index
    %9 = vector.load %arg4[%c0_8, %c0_9] : memref<32x32xbf16, #tpu.memory_space<vmem>>, vector<32x32xbf16>
    %c0_10 = arith.constant 0 : index
    %c0_11 = arith.constant 0 : index
    %10 = vector.load %arg5[%c0_10, %c0_11] : memref<32x32xbf16, #tpu.memory_space<vmem>>, vector<32x32xbf16>
    %c0_12 = arith.constant 0 : index
    %c0_13 = arith.constant 0 : index
    %11 = vector.load %arg6[%c0_12, %c0_13] : memref<32x32xbf16, #tpu.memory_space<vmem>>, vector<32x32xbf16>
    %c0_14 = arith.constant 0 : index
    %c0_15 = arith.constant 0 : index
    %12 = vector.load %arg7[%c0_14, %c0_15] : memref<32x32xbf16, #tpu.memory_space<vmem>>, vector<32x32xbf16>
    %cst = arith.constant dense<0.000000e+00> : vector<8x32xf32>
    %13 = tpu.matmul %2, %9, %cst {dimension_numbers = #tpu.dot_dimension_numbers<[1], [1], [0], [0], [0, 0, 1, 0], [], []>} : vector<8x32xbf16>, vector<32x32xbf16>, vector<8x32xf32> -> vector<8x32xf32>
    %cst_16 = arith.constant dense<0.000000e+00> : vector<8x32xf32>
    %14 = tpu.matmul %5, %10, %cst_16 {dimension_numbers = #tpu.dot_dimension_numbers<[1], [1], [0], [0], [0, 0, 1, 0], [], []>} : vector<8x32xbf16>, vector<32x32xbf16>, vector<8x32xf32> -> vector<8x32xf32>
    %cst_17 = arith.constant dense<0.000000e+00> : vector<8x32xf32>
    %15 = tpu.matmul %8, %11, %cst_17 {dimension_numbers = #tpu.dot_dimension_numbers<[1], [1], [0], [0], [0, 0, 1, 0], [], []>} : vector<8x32xbf16>, vector<32x32xbf16>, vector<8x32xf32> -> vector<8x32xf32>
    %cst_18 = arith.constant 5.000000e-01 : f32
    %16 = vector.broadcast %cst_18 : f32 to vector<8x32xf32>
    %17 = arith.mulf %13, %16 : vector<8x32xf32>
    %18 = vector.shape_cast %17 : vector<8x32xf32> to vector<1x8x32xf32>
    %19 = arith.truncf %18 : vector<1x8x32xf32> to vector<1x8x32xbf16>
    %20 = vector.shape_cast %14 : vector<8x32xf32> to vector<1x8x32xf32>
    %21 = arith.truncf %20 : vector<1x8x32xf32> to vector<1x8x32xbf16>
    %22 = vector.shape_cast %15 : vector<8x32xf32> to vector<1x8x32xf32>
    %23 = arith.truncf %22 : vector<1x8x32xf32> to vector<1x8x32xbf16>
    %24 = vector.extract_strided_slice %19 {offsets = [0, 0, 0], sizes = [1, 8, 4], strides = [1, 1, 1]} : vector<1x8x32xbf16> to vector<1x8x4xbf16>
    %25 = vector.extract_strided_slice %21 {offsets = [0, 0, 0], sizes = [1, 8, 4], strides = [1, 1, 1]} : vector<1x8x32xbf16> to vector<1x8x4xbf16>
    %26 = vector.extract_strided_slice %23 {offsets = [0, 0, 0], sizes = [1, 8, 4], strides = [1, 1, 1]} : vector<1x8x32xbf16> to vector<1x8x4xbf16>
    "tpu.trace_start"() <{level = 10 : i32, message = "bqd,bkd->bqk"}> : () -> ()
    %cst_19 = arith.constant dense<0.000000e+00> : vector<1x8x8xf32>
    %27 = tpu.matmul %24, %25, %cst_19 {dimension_numbers = #tpu.dot_dimension_numbers<[2], [2], [1], [1], [0, 0, 0, 1, 1, 1], [0], [0]>} : vector<1x8x4xbf16>, vector<1x8x4xbf16>, vector<1x8x8xf32> -> vector<1x8x8xf32>
    "tpu.trace_stop"() : () -> ()
    %cst_20 = arith.constant dense<0xFF800000> : vector<1x8xf32>
    %28 = vector.multi_reduction <maximumf>, %27, %cst_20 [2] : vector<1x8x8xf32> to vector<1x8xf32>
    %29 = vector.shape_cast %28 : vector<1x8xf32> to vector<1x8x1xf32>
    %30 = vector.broadcast %29 : vector<1x8x1xf32> to vector<1x8x8xf32>
    %31 = arith.subf %27, %30 : vector<1x8x8xf32>
    %32 = math.exp %31 : vector<1x8x8xf32>
    %cst_21 = arith.constant dense<0.000000e+00> : vector<1x8xf32>
    %33 = vector.multi_reduction <add>, %32, %cst_21 [2] : vector<1x8x8xf32> to vector<1x8xf32>
    %34 = vector.shape_cast %33 : vector<1x8xf32> to vector<1x8x1xf32>
    %35 = tpu.reciprocal %34 {approx = true} : vector<1x8x1xf32> -> vector<1x8x1xf32>
    %36 = vector.broadcast %35 : vector<1x8x1xf32> to vector<1x8x8xf32>
    %37 = arith.mulf %32, %36 : vector<1x8x8xf32>
    %38 = arith.truncf %37 : vector<1x8x8xf32> to vector<1x8x8xbf16>
    "tpu.trace_start"() <{level = 10 : i32, message = "bqk,bkd->bqd"}> : () -> ()
    %cst_22 = arith.constant dense<0.000000e+00> : vector<1x8x4xf32>
    %39 = tpu.matmul %38, %26, %cst_22 {dimension_numbers = #tpu.dot_dimension_numbers<[2], [1], [1], [2], [0, 0, 0, 1, 1, 2], [0], [0]>} : vector<1x8x8xbf16>, vector<1x8x4xbf16>, vector<1x8x4xf32> -> vector<1x8x4xf32>
    "tpu.trace_stop"() : () -> ()
    %c0_23 = arith.constant 0 : index
    %c0_24 = arith.constant 0 : index
    %c0_25 = arith.constant 0 : index
    %40 = vector.load %arg10[%c0_23, %c0_24, %c0_25] : memref<1x8x32xf32, #tpu.memory_space<vmem>>, vector<1x8x4xf32>
    tpu.vector_store %arg10[%c0_23, %c0_24, %c0_25], %39 {strides = array<i32>} : memref<1x8x32xf32, #tpu.memory_space<vmem>>, vector<1x8x4xf32>,
    %41 = vector.extract_strided_slice %19 {offsets = [0, 0, 4], sizes = [1, 8, 4], strides = [1, 1, 1]} : vector<1x8x32xbf16> to vector<1x8x4xbf16>
    %42 = vector.extract_strided_slice %21 {offsets = [0, 0, 4], sizes = [1, 8, 4], strides = [1, 1, 1]} : vector<1x8x32xbf16> to vector<1x8x4xbf16>
    %43 = vector.extract_strided_slice %23 {offsets = [0, 0, 4], sizes = [1, 8, 4], strides = [1, 1, 1]} : vector<1x8x32xbf16> to vector<1x8x4xbf16>
    "tpu.trace_start"() <{level = 10 : i32, message = "bqd,bkd->bqk"}> : () -> ()
    %cst_26 = arith.constant dense<0.000000e+00> : vector<1x8x8xf32>
    %44 = tpu.matmul %41, %42, %cst_26 {dimension_numbers = #tpu.dot_dimension_numbers<[2], [2], [1], [1], [0, 0, 0, 1, 1, 1], [0], [0]>} : vector<1x8x4xbf16>, vector<1x8x4xbf16>, vector<1x8x8xf32> -> vector<1x8x8xf32>
    "tpu.trace_stop"() : () -> ()
    %cst_27 = arith.constant dense<0xFF800000> : vector<1x8xf32>
    %45 = vector.multi_reduction <maximumf>, %44, %cst_27 [2] : vector<1x8x8xf32> to vector<1x8xf32>
    %46 = vector.shape_cast %45 : vector<1x8xf32> to vector<1x8x1xf32>
    %47 = vector.broadcast %46 : vector<1x8x1xf32> to vector<1x8x8xf32>
    %48 = arith.subf %44, %47 : vector<1x8x8xf32>
    %49 = math.exp %48 : vector<1x8x8xf32>
    %cst_28 = arith.constant dense<0.000000e+00> : vector<1x8xf32>
    %50 = vector.multi_reduction <add>, %49, %cst_28 [2] : vector<1x8x8xf32> to vector<1x8xf32>
    %51 = vector.shape_cast %50 : vector<1x8xf32> to vector<1x8x1xf32>
    %52 = tpu.reciprocal %51 {approx = true} : vector<1x8x1xf32> -> vector<1x8x1xf32>
    %53 = vector.broadcast %52 : vector<1x8x1xf32> to vector<1x8x8xf32>
    %54 = arith.mulf %49, %53 : vector<1x8x8xf32>
    %55 = arith.truncf %54 : vector<1x8x8xf32> to vector<1x8x8xbf16>
    "tpu.trace_start"() <{level = 10 : i32, message = "bqk,bkd->bqd"}> : () -> ()
    %cst_29 = arith.constant dense<0.000000e+00> : vector<1x8x4xf32>
    %56 = tpu.matmul %55, %43, %cst_29 {dimension_numbers = #tpu.dot_dimension_numbers<[2], [1], [1], [2], [0, 0, 0, 1, 1, 2], [0], [0]>} : vector<1x8x8xbf16>, vector<1x8x4xbf16>, vector<1x8x4xf32> -> vector<1x8x4xf32>
    "tpu.trace_stop"() : () -> ()
    %c0_30 = arith.constant 0 : index
    %c0_31 = arith.constant 0 : index
    %c4 = arith.constant 4 : index
    %57 = vector.load %arg10[%c0_30, %c0_31, %c4] : memref<1x8x32xf32, #tpu.memory_space<vmem>>, vector<1x8x4xf32>
    tpu.vector_store %arg10[%c0_30, %c0_31, %c4], %56 {strides = array<i32>} : memref<1x8x32xf32, #tpu.memory_space<vmem>>, vector<1x8x4xf32>,
    %58 = vector.extract_strided_slice %19 {offsets = [0, 0, 8], sizes = [1, 8, 4], strides = [1, 1, 1]} : vector<1x8x32xbf16> to vector<1x8x4xbf16>
    %59 = vector.extract_strided_slice %21 {offsets = [0, 0, 8], sizes = [1, 8, 4], strides = [1, 1, 1]} : vector<1x8x32xbf16> to vector<1x8x4xbf16>
    %60 = vector.extract_strided_slice %23 {offsets = [0, 0, 8], sizes = [1, 8, 4], strides = [1, 1, 1]} : vector<1x8x32xbf16> to vector<1x8x4xbf16>
    "tpu.trace_start"() <{level = 10 : i32, message = "bqd,bkd->bqk"}> : () -> ()
    %cst_32 = arith.constant dense<0.000000e+00> : vector<1x8x8xf32>
    %61 = tpu.matmul %58, %59, %cst_32 {dimension_numbers = #tpu.dot_dimension_numbers<[2], [2], [1], [1], [0, 0, 0, 1, 1, 1], [0], [0]>} : vector<1x8x4xbf16>, vector<1x8x4xbf16>, vector<1x8x8xf32> -> vector<1x8x8xf32>
    "tpu.trace_stop"() : () -> ()
    %cst_33 = arith.constant dense<0xFF800000> : vector<1x8xf32>
    %62 = vector.multi_reduction <maximumf>, %61, %cst_33 [2] : vector<1x8x8xf32> to vector<1x8xf32>
    %63 = vector.shape_cast %62 : vector<1x8xf32> to vector<1x8x1xf32>
    %64 = vector.broadcast %63 : vector<1x8x1xf32> to vector<1x8x8xf32>
    %65 = arith.subf %61, %64 : vector<1x8x8xf32>
    %66 = math.exp %65 : vector<1x8x8xf32>
    %cst_34 = arith.constant dense<0.000000e+00> : vector<1x8xf32>
    %67 = vector.multi_reduction <add>, %66, %cst_34 [2] : vector<1x8x8xf32> to vector<1x8xf32>
    %68 = vector.shape_cast %67 : vector<1x8xf32> to vector<1x8x1xf32>
    %69 = tpu.reciprocal %68 {approx = true} : vector<1x8x1xf32> -> vector<1x8x1xf32>
    %70 = vector.broadcast %69 : vector<1x8x1xf32> to vector<1x8x8xf32>
    %71 = arith.mulf %66, %70 : vector<1x8x8xf32>
    %72 = arith.truncf %71 : vector<1x8x8xf32> to vector<1x8x8xbf16>
    "tpu.trace_start"() <{level = 10 : i32, message = "bqk,bkd->bqd"}> : () -> ()
    %cst_35 = arith.constant dense<0.000000e+00> : vector<1x8x4xf32>
    %73 = tpu.matmul %72, %60, %cst_35 {dimension_numbers = #tpu.dot_dimension_numbers<[2], [1], [1], [2], [0, 0, 0, 1, 1, 2], [0], [0]>} : vector<1x8x8xbf16>, vector<1x8x4xbf16>, vector<1x8x4xf32> -> vector<1x8x4xf32>
    "tpu.trace_stop"() : () -> ()
    %c0_36 = arith.constant 0 : index
    %c0_37 = arith.constant 0 : index
    %c8 = arith.constant 8 : index
    %74 = vector.load %arg10[%c0_36, %c0_37, %c8] : memref<1x8x32xf32, #tpu.memory_space<vmem>>, vector<1x8x4xf32>
    tpu.vector_store %arg10[%c0_36, %c0_37, %c8], %73 {strides = array<i32>} : memref<1x8x32xf32, #tpu.memory_space<vmem>>, vector<1x8x4xf32>,
    %75 = vector.extract_strided_slice %19 {offsets = [0, 0, 12], sizes = [1, 8, 4], strides = [1, 1, 1]} : vector<1x8x32xbf16> to vector<1x8x4xbf16>
    %76 = vector.extract_strided_slice %21 {offsets = [0, 0, 12], sizes = [1, 8, 4], strides = [1, 1, 1]} : vector<1x8x32xbf16> to vector<1x8x4xbf16>
    %77 = vector.extract_strided_slice %23 {offsets = [0, 0, 12], sizes = [1, 8, 4], strides = [1, 1, 1]} : vector<1x8x32xbf16> to vector<1x8x4xbf16>
    "tpu.trace_start"() <{level = 10 : i32, message = "bqd,bkd->bqk"}> : () -> ()
    %cst_38 = arith.constant dense<0.000000e+00> : vector<1x8x8xf32>
    %78 = tpu.matmul %75, %76, %cst_38 {dimension_numbers = #tpu.dot_dimension_numbers<[2], [2], [1], [1], [0, 0, 0, 1, 1, 1], [0], [0]>} : vector<1x8x4xbf16>, vector<1x8x4xbf16>, vector<1x8x8xf32> -> vector<1x8x8xf32>
    "tpu.trace_stop"() : () -> ()
    %cst_39 = arith.constant dense<0xFF800000> : vector<1x8xf32>
    %79 = vector.multi_reduction <maximumf>, %78, %cst_39 [2] : vector<1x8x8xf32> to vector<1x8xf32>
    %80 = vector.shape_cast %79 : vector<1x8xf32> to vector<1x8x1xf32>
    %81 = vector.broadcast %80 : vector<1x8x1xf32> to vector<1x8x8xf32>
    %82 = arith.subf %78, %81 : vector<1x8x8xf32>
    %83 = math.exp %82 : vector<1x8x8xf32>
    %cst_40 = arith.constant dense<0.000000e+00> : vector<1x8xf32>
    %84 = vector.multi_reduction <add>, %83, %cst_40 [2] : vector<1x8x8xf32> to vector<1x8xf32>
    %85 = vector.shape_cast %84 : vector<1x8xf32> to vector<1x8x1xf32>
    %86 = tpu.reciprocal %85 {approx = true} : vector<1x8x1xf32> -> vector<1x8x1xf32>
    %87 = vector.broadcast %86 : vector<1x8x1xf32> to vector<1x8x8xf32>
    %88 = arith.mulf %83, %87 : vector<1x8x8xf32>
    %89 = arith.truncf %88 : vector<1x8x8xf32> to vector<1x8x8xbf16>
    "tpu.trace_start"() <{level = 10 : i32, message = "bqk,bkd->bqd"}> : () -> ()
    %cst_41 = arith.constant dense<0.000000e+00> : vector<1x8x4xf32>
    %90 = tpu.matmul %89, %77, %cst_41 {dimension_numbers = #tpu.dot_dimension_numbers<[2], [1], [1], [2], [0, 0, 0, 1, 1, 2], [0], [0]>} : vector<1x8x8xbf16>, vector<1x8x4xbf16>, vector<1x8x4xf32> -> vector<1x8x4xf32>
    "tpu.trace_stop"() : () -> ()
    %c0_42 = arith.constant 0 : index
    %c0_43 = arith.constant 0 : index
    %c12 = arith.constant 12 : index
    %91 = vector.load %arg10[%c0_42, %c0_43, %c12] : memref<1x8x32xf32, #tpu.memory_space<vmem>>, vector<1x8x4xf32>
    tpu.vector_store %arg10[%c0_42, %c0_43, %c12], %90 {strides = array<i32>} : memref<1x8x32xf32, #tpu.memory_space<vmem>>, vector<1x8x4xf32>,
    %92 = vector.extract_strided_slice %19 {offsets = [0, 0, 16], sizes = [1, 8, 4], strides = [1, 1, 1]} : vector<1x8x32xbf16> to vector<1x8x4xbf16>
    %93 = vector.extract_strided_slice %21 {offsets = [0, 0, 16], sizes = [1, 8, 4], strides = [1, 1, 1]} : vector<1x8x32xbf16> to vector<1x8x4xbf16>
    %94 = vector.extract_strided_slice %23 {offsets = [0, 0, 16], sizes = [1, 8, 4], strides = [1, 1, 1]} : vector<1x8x32xbf16> to vector<1x8x4xbf16>
    "tpu.trace_start"() <{level = 10 : i32, message = "bqd,bkd->bqk"}> : () -> ()
    %cst_44 = arith.constant dense<0.000000e+00> : vector<1x8x8xf32>
    %95 = tpu.matmul %92, %93, %cst_44 {dimension_numbers = #tpu.dot_dimension_numbers<[2], [2], [1], [1], [0, 0, 0, 1, 1, 1], [0], [0]>} : vector<1x8x4xbf16>, vector<1x8x4xbf16>, vector<1x8x8xf32> -> vector<1x8x8xf32>
    "tpu.trace_stop"() : () -> ()
    %cst_45 = arith.constant dense<0xFF800000> : vector<1x8xf32>
    %96 = vector.multi_reduction <maximumf>, %95, %cst_45 [2] : vector<1x8x8xf32> to vector<1x8xf32>
    %97 = vector.shape_cast %96 : vector<1x8xf32> to vector<1x8x1xf32>
    %98 = vector.broadcast %97 : vector<1x8x1xf32> to vector<1x8x8xf32>
    %99 = arith.subf %95, %98 : vector<1x8x8xf32>
    %100 = math.exp %99 : vector<1x8x8xf32>
    %cst_46 = arith.constant dense<0.000000e+00> : vector<1x8xf32>
    %101 = vector.multi_reduction <add>, %100, %cst_46 [2] : vector<1x8x8xf32> to vector<1x8xf32>
    %102 = vector.shape_cast %101 : vector<1x8xf32> to vector<1x8x1xf32>
    %103 = tpu.reciprocal %102 {approx = true} : vector<1x8x1xf32> -> vector<1x8x1xf32>
    %104 = vector.broadcast %103 : vector<1x8x1xf32> to vector<1x8x8xf32>
    %105 = arith.mulf %100, %104 : vector<1x8x8xf32>
    %106 = arith.truncf %105 : vector<1x8x8xf32> to vector<1x8x8xbf16>
    "tpu.trace_start"() <{level = 10 : i32, message = "bqk,bkd->bqd"}> : () -> ()
    %cst_47 = arith.constant dense<0.000000e+00> : vector<1x8x4xf32>
    %107 = tpu.matmul %106, %94, %cst_47 {dimension_numbers = #tpu.dot_dimension_numbers<[2], [1], [1], [2], [0, 0, 0, 1, 1, 2], [0], [0]>} : vector<1x8x8xbf16>, vector<1x8x4xbf16>, vector<1x8x4xf32> -> vector<1x8x4xf32>
    "tpu.trace_stop"() : () -> ()
    %c0_48 = arith.constant 0 : index
    %c0_49 = arith.constant 0 : index
    %c16 = arith.constant 16 : index
    %108 = vector.load %arg10[%c0_48, %c0_49, %c16] : memref<1x8x32xf32, #tpu.memory_space<vmem>>, vector<1x8x4xf32>
    tpu.vector_store %arg10[%c0_48, %c0_49, %c16], %107 {strides = array<i32>} : memref<1x8x32xf32, #tpu.memory_space<vmem>>, vector<1x8x4xf32>,
    %109 = vector.extract_strided_slice %19 {offsets = [0, 0, 20], sizes = [1, 8, 4], strides = [1, 1, 1]} : vector<1x8x32xbf16> to vector<1x8x4xbf16>
    %110 = vector.extract_strided_slice %21 {offsets = [0, 0, 20], sizes = [1, 8, 4], strides = [1, 1, 1]} : vector<1x8x32xbf16> to vector<1x8x4xbf16>
    %111 = vector.extract_strided_slice %23 {offsets = [0, 0, 20], sizes = [1, 8, 4], strides = [1, 1, 1]} : vector<1x8x32xbf16> to vector<1x8x4xbf16>
    "tpu.trace_start"() <{level = 10 : i32, message = "bqd,bkd->bqk"}> : () -> ()
    %cst_50 = arith.constant dense<0.000000e+00> : vector<1x8x8xf32>
    %112 = tpu.matmul %109, %110, %cst_50 {dimension_numbers = #tpu.dot_dimension_numbers<[2], [2], [1], [1], [0, 0, 0, 1, 1, 1], [0], [0]>} : vector<1x8x4xbf16>, vector<1x8x4xbf16>, vector<1x8x8xf32> -> vector<1x8x8xf32>
    "tpu.trace_stop"() : () -> ()
    %cst_51 = arith.constant dense<0xFF800000> : vector<1x8xf32>
    %113 = vector.multi_reduction <maximumf>, %112, %cst_51 [2] : vector<1x8x8xf32> to vector<1x8xf32>
    %114 = vector.shape_cast %113 : vector<1x8xf32> to vector<1x8x1xf32>
    %115 = vector.broadcast %114 : vector<1x8x1xf32> to vector<1x8x8xf32>
    %116 = arith.subf %112, %115 : vector<1x8x8xf32>
    %117 = math.exp %116 : vector<1x8x8xf32>
    %cst_52 = arith.constant dense<0.000000e+00> : vector<1x8xf32>
    %118 = vector.multi_reduction <add>, %117, %cst_52 [2] : vector<1x8x8xf32> to vector<1x8xf32>
    %119 = vector.shape_cast %118 : vector<1x8xf32> to vector<1x8x1xf32>
    %120 = tpu.reciprocal %119 {approx = true} : vector<1x8x1xf32> -> vector<1x8x1xf32>
    %121 = vector.broadcast %120 : vector<1x8x1xf32> to vector<1x8x8xf32>
    %122 = arith.mulf %117, %121 : vector<1x8x8xf32>
    %123 = arith.truncf %122 : vector<1x8x8xf32> to vector<1x8x8xbf16>
    "tpu.trace_start"() <{level = 10 : i32, message = "bqk,bkd->bqd"}> : () -> ()
    %cst_53 = arith.constant dense<0.000000e+00> : vector<1x8x4xf32>
    %124 = tpu.matmul %123, %111, %cst_53 {dimension_numbers = #tpu.dot_dimension_numbers<[2], [1], [1], [2], [0, 0, 0, 1, 1, 2], [0], [0]>} : vector<1x8x8xbf16>, vector<1x8x4xbf16>, vector<1x8x4xf32> -> vector<1x8x4xf32>
    "tpu.trace_stop"() : () -> ()
    %c0_54 = arith.constant 0 : index
    %c0_55 = arith.constant 0 : index
    %c20 = arith.constant 20 : index
    %125 = vector.load %arg10[%c0_54, %c0_55, %c20] : memref<1x8x32xf32, #tpu.memory_space<vmem>>, vector<1x8x4xf32>
    tpu.vector_store %arg10[%c0_54, %c0_55, %c20], %124 {strides = array<i32>} : memref<1x8x32xf32, #tpu.memory_space<vmem>>, vector<1x8x4xf32>,
    %126 = vector.extract_strided_slice %19 {offsets = [0, 0, 24], sizes = [1, 8, 4], strides = [1, 1, 1]} : vector<1x8x32xbf16> to vector<1x8x4xbf16>
    %127 = vector.extract_strided_slice %21 {offsets = [0, 0, 24], sizes = [1, 8, 4], strides = [1, 1, 1]} : vector<1x8x32xbf16> to vector<1x8x4xbf16>
    %128 = vector.extract_strided_slice %23 {offsets = [0, 0, 24], sizes = [1, 8, 4], strides = [1, 1, 1]} : vector<1x8x32xbf16> to vector<1x8x4xbf16>
    "tpu.trace_start"() <{level = 10 : i32, message = "bqd,bkd->bqk"}> : () -> ()
    %cst_56 = arith.constant dense<0.000000e+00> : vector<1x8x8xf32>
    %129 = tpu.matmul %126, %127, %cst_56 {dimension_numbers = #tpu.dot_dimension_numbers<[2], [2], [1], [1], [0, 0, 0, 1, 1, 1], [0], [0]>} : vector<1x8x4xbf16>, vector<1x8x4xbf16>, vector<1x8x8xf32> -> vector<1x8x8xf32>
    "tpu.trace_stop"() : () -> ()
    %cst_57 = arith.constant dense<0xFF800000> : vector<1x8xf32>
    %130 = vector.multi_reduction <maximumf>, %129, %cst_57 [2] : vector<1x8x8xf32> to vector<1x8xf32>
    %131 = vector.shape_cast %130 : vector<1x8xf32> to vector<1x8x1xf32>
    %132 = vector.broadcast %131 : vector<1x8x1xf32> to vector<1x8x8xf32>
    %133 = arith.subf %129, %132 : vector<1x8x8xf32>
    %134 = math.exp %133 : vector<1x8x8xf32>
    %cst_58 = arith.constant dense<0.000000e+00> : vector<1x8xf32>
    %135 = vector.multi_reduction <add>, %134, %cst_58 [2] : vector<1x8x8xf32> to vector<1x8xf32>
    %136 = vector.shape_cast %135 : vector<1x8xf32> to vector<1x8x1xf32>
    %137 = tpu.reciprocal %136 {approx = true} : vector<1x8x1xf32> -> vector<1x8x1xf32>
    %138 = vector.broadcast %137 : vector<1x8x1xf32> to vector<1x8x8xf32>
    %139 = arith.mulf %134, %138 : vector<1x8x8xf32>
    %140 = arith.truncf %139 : vector<1x8x8xf32> to vector<1x8x8xbf16>
    "tpu.trace_start"() <{level = 10 : i32, message = "bqk,bkd->bqd"}> : () -> ()
    %cst_59 = arith.constant dense<0.000000e+00> : vector<1x8x4xf32>
    %141 = tpu.matmul %140, %128, %cst_59 {dimension_numbers = #tpu.dot_dimension_numbers<[2], [1], [1], [2], [0, 0, 0, 1, 1, 2], [0], [0]>} : vector<1x8x8xbf16>, vector<1x8x4xbf16>, vector<1x8x4xf32> -> vector<1x8x4xf32>
    "tpu.trace_stop"() : () -> ()
    %c0_60 = arith.constant 0 : index
    %c0_61 = arith.constant 0 : index
    %c24 = arith.constant 24 : index
    %142 = vector.load %arg10[%c0_60, %c0_61, %c24] : memref<1x8x32xf32, #tpu.memory_space<vmem>>, vector<1x8x4xf32>
    tpu.vector_store %arg10[%c0_60, %c0_61, %c24], %141 {strides = array<i32>} : memref<1x8x32xf32, #tpu.memory_space<vmem>>, vector<1x8x4xf32>,
    %143 = vector.extract_strided_slice %19 {offsets = [0, 0, 28], sizes = [1, 8, 4], strides = [1, 1, 1]} : vector<1x8x32xbf16> to vector<1x8x4xbf16>
    %144 = vector.extract_strided_slice %21 {offsets = [0, 0, 28], sizes = [1, 8, 4], strides = [1, 1, 1]} : vector<1x8x32xbf16> to vector<1x8x4xbf16>
    %145 = vector.extract_strided_slice %23 {offsets = [0, 0, 28], sizes = [1, 8, 4], strides = [1, 1, 1]} : vector<1x8x32xbf16> to vector<1x8x4xbf16>
    "tpu.trace_start"() <{level = 10 : i32, message = "bqd,bkd->bqk"}> : () -> ()
    %cst_62 = arith.constant dense<0.000000e+00> : vector<1x8x8xf32>
    %146 = tpu.matmul %143, %144, %cst_62 {dimension_numbers = #tpu.dot_dimension_numbers<[2], [2], [1], [1], [0, 0, 0, 1, 1, 1], [0], [0]>} : vector<1x8x4xbf16>, vector<1x8x4xbf16>, vector<1x8x8xf32> -> vector<1x8x8xf32>
    "tpu.trace_stop"() : () -> ()
    %cst_63 = arith.constant dense<0xFF800000> : vector<1x8xf32>
    %147 = vector.multi_reduction <maximumf>, %146, %cst_63 [2] : vector<1x8x8xf32> to vector<1x8xf32>
    %148 = vector.shape_cast %147 : vector<1x8xf32> to vector<1x8x1xf32>
    %149 = vector.broadcast %148 : vector<1x8x1xf32> to vector<1x8x8xf32>
    %150 = arith.subf %146, %149 : vector<1x8x8xf32>
    %151 = math.exp %150 : vector<1x8x8xf32>
    %cst_64 = arith.constant dense<0.000000e+00> : vector<1x8xf32>
    %152 = vector.multi_reduction <add>, %151, %cst_64 [2] : vector<1x8x8xf32> to vector<1x8xf32>
    %153 = vector.shape_cast %152 : vector<1x8xf32> to vector<1x8x1xf32>
    %154 = tpu.reciprocal %153 {approx = true} : vector<1x8x1xf32> -> vector<1x8x1xf32>
    %155 = vector.broadcast %154 : vector<1x8x1xf32> to vector<1x8x8xf32>
    %156 = arith.mulf %151, %155 : vector<1x8x8xf32>
    %157 = arith.truncf %156 : vector<1x8x8xf32> to vector<1x8x8xbf16>
    "tpu.trace_start"() <{level = 10 : i32, message = "bqk,bkd->bqd"}> : () -> ()
    %cst_65 = arith.constant dense<0.000000e+00> : vector<1x8x4xf32>
    %158 = tpu.matmul %157, %145, %cst_65 {dimension_numbers = #tpu.dot_dimension_numbers<[2], [1], [1], [2], [0, 0, 0, 1, 1, 2], [0], [0]>} : vector<1x8x8xbf16>, vector<1x8x4xbf16>, vector<1x8x4xf32> -> vector<1x8x4xf32>
    "tpu.trace_stop"() : () -> ()
    %c0_66 = arith.constant 0 : index
    %c0_67 = arith.constant 0 : index
    %c28 = arith.constant 28 : index
    %159 = vector.load %arg10[%c0_66, %c0_67, %c28] : memref<1x8x32xf32, #tpu.memory_space<vmem>>, vector<1x8x4xf32>
    tpu.vector_store %arg10[%c0_66, %c0_67, %c28], %158 {strides = array<i32>} : memref<1x8x32xf32, #tpu.memory_space<vmem>>, vector<1x8x4xf32>,
    %c0_68 = arith.constant 0 : index
    %c0_69 = arith.constant 0 : index
    %c0_70 = arith.constant 0 : index
    %160 = vector.load %arg10[%c0_68, %c0_69, %c0_70] : memref<1x8x32xf32, #tpu.memory_space<vmem>>, vector<1x8x32xf32>
    %161 = vector.shape_cast %160 : vector<1x8x32xf32> to vector<8x32xf32>
    %162 = arith.truncf %161 : vector<8x32xf32> to vector<8x32xbf16>
    %cst_71 = arith.constant dense<0.000000e+00> : vector<8x32xf32>
    %163 = tpu.matmul %162, %12, %cst_71 {dimension_numbers = #tpu.dot_dimension_numbers<[1], [1], [0], [0], [0, 0, 1, 0], [], []>} : vector<8x32xbf16>, vector<32x32xbf16>, vector<8x32xf32> -> vector<8x32xf32>
    %c0_72 = arith.constant 0 : index
    %c0_73 = arith.constant 0 : index
    %164 = vector.load %arg8[%c0_72, %c0_73] : memref<1x32xf32, #tpu.memory_space<vmem>>, vector<1x32xf32>
    %165 = vector.broadcast %164 : vector<1x32xf32> to vector<8x32xf32>
    %166 = arith.addf %163, %165 : vector<8x32xf32>
    %167 = vector.shape_cast %166 : vector<8x32xf32> to vector<1x8x32xf32>
    %c0_74 = arith.constant 0 : index
    %c0_75 = arith.constant 0 : index
    %c0_76 = arith.constant 0 : index
    %168 = vector.load %arg9[%c0_74, %c0_75, %c0_76] : memref<1x8x32xf32, #tpu.memory_space<vmem>>, vector<1x8x32xf32>
    tpu.vector_store %arg9[%c0_74, %c0_75, %c0_76], %167 {strides = array<i32>} : memref<1x8x32xf32, #tpu.memory_space<vmem>>, vector<1x8x32xf32>,
    return
  }
  func.func @transform_0(%arg0: i32) -> (i32, i32, i32) {
    %c0_i32 = arith.constant 0 : i32
    %c0_i32_0 = arith.constant 0 : i32
    %c0_i32_1 = arith.constant 0 : i32
    return %arg0, %c0_i32, %c0_i32_0 : i32, i32, i32
  }
  func.func @transform_1(%arg0: i32) -> (i32, i32, i32) {
    %c0_i32 = arith.constant 0 : i32
    %c0_i32_0 = arith.constant 0 : i32
    %c0_i32_1 = arith.constant 0 : i32
    return %arg0, %c0_i32, %c0_i32_0 : i32, i32, i32
  }
  func.func @transform_2(%arg0: i32) -> (i32, i32, i32) {
    %c0_i32 = arith.constant 0 : i32
    %c0_i32_0 = arith.constant 0 : i32
    %c0_i32_1 = arith.constant 0 : i32
    return %arg0, %c0_i32, %c0_i32_0 : i32, i32, i32
  }
  func.func @transform_3(%arg0: i32) -> (i32, i32) {
    %c0_i32 = arith.constant 0 : i32
    %c0_i32_0 = arith.constant 0 : i32
    %c0_i32_1 = arith.constant 0 : i32
    return %c0_i32, %c0_i32_0 : i32, i32
  }
  func.func @transform_4(%arg0: i32) -> (i32, i32) {
    %c0_i32 = arith.constant 0 : i32
    %c0_i32_0 = arith.constant 0 : i32
    %c0_i32_1 = arith.constant 0 : i32
    return %c0_i32, %c0_i32_0 : i32, i32
  }
  func.func @transform_5(%arg0: i32) -> (i32, i32) {
    %c0_i32 = arith.constant 0 : i32
    %c0_i32_0 = arith.constant 0 : i32
    %c0_i32_1 = arith.constant 0 : i32
    return %c0_i32, %c0_i32_0 : i32, i32
  }
  func.func @transform_6(%arg0: i32) -> (i32, i32) {
    %c0_i32 = arith.constant 0 : i32
    %c0_i32_0 = arith.constant 0 : i32
    %c0_i32_1 = arith.constant 0 : i32
    return %c0_i32, %c0_i32_0 : i32, i32
  }
  func.func @transform_7(%arg0: i32) -> (i32, i32) {
    %c0_i32 = arith.constant 0 : i32
    %c0_i32_0 = arith.constant 0 : i32
    %c0_i32_1 = arith.constant 0 : i32
    return %c0_i32, %c0_i32_0 : i32, i32
  }
  func.func @transform_8(%arg0: i32) -> (i32, i32, i32) {
    %c0_i32 = arith.constant 0 : i32
    %c0_i32_0 = arith.constant 0 : i32
    %c0_i32_1 = arith.constant 0 : i32
    return %arg0, %c0_i32, %c0_i32_0 : i32, i32, i32
  }
}

</mosaic_0001>

<llo_original>
// kernel: tpu_custom_call.1
$region0: #{tpu_custom_call.1}
  #allocation0 [shape = 'u32[]', space=smem, size = 0x4, offset = 0x4, fixed_abs, tag = 'smem constant byte address 0x4 - core index']
  #allocation1 [shape = 'u32[72,128]{1,0:T(1,128)}', space=vmem, size = 0x9000, scoped, tag = 'internal scratch']
  #allocation2 [shape = 'f32[1,8,32]{2,1,0:T(8,128)}', space=vmem, size = 0x1000, scoped, tag = 'scratch operand']
  %s0 = inlined_call_operand.hbm [shape: f32[2,8,32], index: 0, kind: input, shape index: {}]
  %s1 = inlined_call_operand.hbm [shape: f32[2,8,32], index: 1, kind: input, shape index: {}]
  %s2 = inlined_call_operand.hbm [shape: f32[2,8,32], index: 2, kind: input, shape index: {}]
  %s3 = inlined_call_operand.hbm [shape: bf16[32,32], index: 3, kind: input, shape index: {}]
  %s4 = inlined_call_operand.hbm [shape: bf16[32,32], index: 4, kind: input, shape index: {}]
  %s5 = inlined_call_operand.hbm [shape: bf16[32,32], index: 5, kind: input, shape index: {}]
  %s6 = inlined_call_operand.hbm [shape: bf16[32,32], index: 6, kind: input, shape index: {}]
  %s7 = inlined_call_operand.vmem [shape: f32[1,32], index: 7, kind: input, shape index: {}]
  %s8 = inlined_call_operand.hbm [shape: f32[2,8,32], index: 8, kind: output, shape index: {}]
  %s9 = sld [smem:[#allocation0]]
  $region93: #{tpu_custom_call.1} parent=0
    _
  %s11 = ssub.s32 1, %s9
  %s12 = scalar_select 0, %s11, %s9
  $region1: #{tpu_custom_call.1} parent=0
    #allocation3 [shape = 'u8[8192]{0}', space=vmem, size = 0x2000, scoped, tag = 'input window, operand 0']
    #allocation4 [shape = 's32[2]{0}', space=sflag, size = 0x8, scoped, tag = 'scoped memory for tpu_custom_call.1']
    #allocation5 [shape = 's32[2]{0}', space=sflag, size = 0x8, scoped, tag = 'scoped memory for tpu_custom_call.1']
    #allocation6 [shape = 'u8[8192]{0}', space=vmem, size = 0x2000, scoped, tag = 'input window, operand 1']
    #allocation7 [shape = 's32[2]{0}', space=sflag, size = 0x8, scoped, tag = 'scoped memory for tpu_custom_call.1']
    #allocation8 [shape = 'u8[8192]{0}', space=vmem, size = 0x2000, scoped, tag = 'input window, operand 2']
    #allocation9 [shape = 'u8[8192]{0}', space=vmem, size = 0x2000, scoped, tag = 'input window, operand 3, single buffered']
    #allocation10 [shape = 's32[1]{0}', space=sflag, size = 0x4, scoped, tag = 'scoped memory for tpu_custom_call.1']
    #allocation11 [shape = 'u8[8192]{0}', space=vmem, size = 0x2000, scoped, tag = 'input window, operand 4, single buffered']
    #allocation12 [shape = 'u8[8192]{0}', space=vmem, size = 0x2000, scoped, tag = 'input window, operand 5, single buffered']
    #allocation13 [shape = 's32[1]{0}', space=sflag, size = 0x4, scoped, tag = 'scoped memory for tpu_custom_call.1']
    #allocation14 [shape = 'u8[8192]{0}', space=vmem, size = 0x2000, scoped, tag = 'input window, operand 6, single buffered']
    #allocation15 [shape = 'u8[8192]{0}', space=vmem, size = 0x2000, scoped, tag = 'output window, operand 0']
    %13 = vsyncpa [#allocation4], 0
    %s14 = scalar_lea.sflag [#allocation4], 1
    %15 = vsyncpa %s14, 0
    %16 = vsyncpa [#allocation7], 0
    %s17 = scalar_lea.sflag [#allocation7], 1
    %18 = vsyncpa %s17, 0
    %19 = vsyncpa [#allocation10], 0
    %20 = vsyncpa [#allocation13], 0
    %21 = vsyncpa [#allocation5], 0
    %s22 = scalar_lea.sflag [#allocation5], 1
    %23 = vsyncpa %s22, 0
    loop: start=0, step=1, limit=4
    $region2: #{tpu_custom_call.1} parent=1 // loop_pre_header
      _
    $region3: #{tpu_custom_call.1} parent=1 // loop_header
      %s25 = sphi 0, %s29
      %p26 = scmp.ge.s32.totalorder %s25, 4
      %s35 = sphi 0, %s37
      %s38 = sphi 0, %s35
      %s39 = sphi 0, %s38
      %s55 = sphi 0, %s39
      %s61 = sphi 0, %s63
      %s64 = sphi 0, %s61
      %s65 = sphi 0, %s64
      %s81 = sphi 0, %s65
      %s87 = sphi 0, %s89
      %s90 = sphi 0, %s87
      %s91 = sphi 0, %s90
      %s107 = sphi 0, %s91
      %s111 = sphi 0, %s111
      %s113 = sphi 0, %s111
      %s114 = sphi 0, %s113
      %s128 = sphi 0, %s114
      %s132 = sphi 0, %s132
      %s134 = sphi 0, %s132
      %s135 = sphi 0, %s134
      %s149 = sphi 0, %s135
      %s153 = sphi 0, %s153
      %s155 = sphi 0, %s153
      %s156 = sphi 0, %s155
      %s170 = sphi 0, %s156
      %s174 = sphi 0, %s174
      %s176 = sphi 0, %s174
      %s177 = sphi 0, %s176
      %s191 = sphi 0, %s177
      %s195 = sphi 0, %s195
      %s197 = sphi 0, %s195
      %s198 = sphi 0, %s197
      %s212 = sphi 0, %s198
      %s218 = sphi 0, %s220
      %s221 = sphi 0, %s218
      %s222 = sphi 0, %s221
      %s238 = sphi 0, %s222
    $region4: #{tpu_custom_call.1} parent=1 // loop_header_branch
      %28 = sbr.rel (%p26) target = $region8
    $region5: #{tpu_custom_call.1} parent=1 // loop_body
      %s30 = ssub.s32 %s25, 1
      %s31 = ssub.s32 %s25, 2
      %s32 = sadd.s32 %s25, 1
      %s33 = ssub.s32 %s25, %s32
      %p34 = scmp.eq.s32.totalorder %s33, 0
      %s36 = sadd.s32 %s35, 1
      %s37 = scalar_select %p34, %s35, %s36
      %p40 = pneg %p34
      %p41 = scmp.eq.s32.totalorder %s25, 1
      %p42 = por %p40, %p41
      %p43 = scmp.ne.s32.totalorder %s35, %s38
      %p44 = scmp.eq.s32.totalorder %s25, 0
      %p45 = por %p43, %p44
      %p46 = scmp.ne.s32.totalorder %s35, %s38
      %p47 = scmp.eq.s32.totalorder %s30, 1
      %p48 = por %p46, %p47
      %p49 = scmp.ne.s32.totalorder %s38, %s39
      %p50 = scmp.eq.s32.totalorder %s30, 0
      %p51 = por %p49, %p50
      %p52 = scmp.ne.s32.totalorder %s38, %s39
      %p53 = scmp.eq.s32.totalorder %s31, 1
      %p54 = por %p52, %p53
      %p56 = scmp.ne.s32.totalorder %s39, %s55
      %p57 = scmp.eq.s32.totalorder %s31, 0
      %p58 = por %p56, %p57
      %s59 = ssub.s32 %s25, %s32
      %p60 = scmp.eq.s32.totalorder %s59, 0
      %s62 = sadd.s32 %s61, 1
      %s63 = scalar_select %p60, %s61, %s62
      %p66 = pneg %p60
      %p67 = scmp.eq.s32.totalorder %s25, 1
      %p68 = por %p66, %p67
      %p69 = scmp.ne.s32.totalorder %s61, %s64
      %p70 = scmp.eq.s32.totalorder %s25, 0
      %p71 = por %p69, %p70
      %p72 = scmp.ne.s32.totalorder %s61, %s64
      %p73 = scmp.eq.s32.totalorder %s30, 1
      %p74 = por %p72, %p73
      %p75 = scmp.ne.s32.totalorder %s64, %s65
      %p76 = scmp.eq.s32.totalorder %s30, 0
      %p77 = por %p75, %p76
      %p78 = scmp.ne.s32.totalorder %s64, %s65
      %p79 = scmp.eq.s32.totalorder %s31, 1
      %p80 = por %p78, %p79
      %p82 = scmp.ne.s32.totalorder %s65, %s81
      %p83 = scmp.eq.s32.totalorder %s31, 0
      %p84 = por %p82, %p83
      %s85 = ssub.s32 %s25, %s32
      %p86 = scmp.eq.s32.totalorder %s85, 0
      %s88 = sadd.s32 %s87, 1
      %s89 = scalar_select %p86, %s87, %s88
      %p92 = pneg %p86
      %p93 = scmp.eq.s32.totalorder %s25, 1
      %p94 = por %p92, %p93
      %p95 = scmp.ne.s32.totalorder %s87, %s90
      %p96 = scmp.eq.s32.totalorder %s25, 0
      %p97 = por %p95, %p96
      %p98 = scmp.ne.s32.totalorder %s87, %s90
      %p99 = scmp.eq.s32.totalorder %s30, 1
      %p100 = por %p98, %p99
      %p101 = scmp.ne.s32.totalorder %s90, %s91
      %p102 = scmp.eq.s32.totalorder %s30, 0
      %p103 = por %p101, %p102
      %p104 = scmp.ne.s32.totalorder %s90, %s91
      %p105 = scmp.eq.s32.totalorder %s31, 1
      %p106 = por %p104, %p105
      %p108 = scmp.ne.s32.totalorder %s91, %s107
      %p109 = scmp.eq.s32.totalorder %s31, 0
      %p110 = por %p108, %p109
      %s112 = sadd.s32 %s111, 1
      %p115 = scmp.eq.s32.totalorder %s25, 1
      %p116 = scmp.ne.s32.totalorder %s111, %s113
      %p117 = scmp.eq.s32.totalorder %s25, 0
      %p118 = por %p116, %p117
      %p119 = scmp.ne.s32.totalorder %s111, %s113
      %p120 = scmp.eq.s32.totalorder %s30, 1
      %p121 = por %p119, %p120
      %p122 = scmp.ne.s32.totalorder %s113, %s114
      %p123 = scmp.eq.s32.totalorder %s30, 0
      %p124 = por %p122, %p123
      %p125 = scmp.ne.s32.totalorder %s113, %s114
      %p126 = scmp.eq.s32.totalorder %s31, 1
      %p127 = por %p125, %p126
      %p129 = scmp.ne.s32.totalorder %s114, %s128
      %p130 = scmp.eq.s32.totalorder %s31, 0
      %p131 = por %p129, %p130
      %s133 = sadd.s32 %s132, 1
      %p136 = scmp.eq.s32.totalorder %s25, 1
      %p137 = scmp.ne.s32.totalorder %s132, %s134
      %p138 = scmp.eq.s32.totalorder %s25, 0
      %p139 = por %p137, %p138
      %p140 = scmp.ne.s32.totalorder %s132, %s134
      %p141 = scmp.eq.s32.totalorder %s30, 1
      %p142 = por %p140, %p141
      %p143 = scmp.ne.s32.totalorder %s134, %s135
      %p144 = scmp.eq.s32.totalorder %s30, 0
      %p145 = por %p143, %p144
      %p146 = scmp.ne.s32.totalorder %s134, %s135
      %p147 = scmp.eq.s32.totalorder %s31, 1
      %p148 = por %p146, %p147
      %p150 = scmp.ne.s32.totalorder %s135, %s149
      %p151 = scmp.eq.s32.totalorder %s31, 0
      %p152 = por %p150, %p151
      %s154 = sadd.s32 %s153, 1
      %p157 = scmp.eq.s32.totalorder %s25, 1
      %p158 = scmp.ne.s32.totalorder %s153, %s155
      %p159 = scmp.eq.s32.totalorder %s25, 0
      %p160 = por %p158, %p159
      %p161 = scmp.ne.s32.totalorder %s153, %s155
      %p162 = scmp.eq.s32.totalorder %s30, 1
      %p163 = por %p161, %p162
      %p164 = scmp.ne.s32.totalorder %s155, %s156
      %p165 = scmp.eq.s32.totalorder %s30, 0
      %p166 = por %p164, %p165
      %p167 = scmp.ne.s32.totalorder %s155, %s156
      %p168 = scmp.eq.s32.totalorder %s31, 1
      %p169 = por %p167, %p168
      %p171 = scmp.ne.s32.totalorder %s156, %s170
      %p172 = scmp.eq.s32.totalorder %s31, 0
      %p173 = por %p171, %p172
      %s175 = sadd.s32 %s174, 1
      %p178 = scmp.eq.s32.totalorder %s25, 1
      %p179 = scmp.ne.s32.totalorder %s174, %s176
      %p180 = scmp.eq.s32.totalorder %s25, 0
      %p181 = por %p179, %p180
      %p182 = scmp.ne.s32.totalorder %s174, %s176
      %p183 = scmp.eq.s32.totalorder %s30, 1
      %p184 = por %p182, %p183
      %p185 = scmp.ne.s32.totalorder %s176, %s177
      %p186 = scmp.eq.s32.totalorder %s30, 0
      %p187 = por %p185, %p186
      %p188 = scmp.ne.s32.totalorder %s176, %s177
      %p189 = scmp.eq.s32.totalorder %s31, 1
      %p190 = por %p188, %p189
      %p192 = scmp.ne.s32.totalorder %s177, %s191
      %p193 = scmp.eq.s32.totalorder %s31, 0
      %p194 = por %p192, %p193
      %s196 = sadd.s32 %s195, 1
      %p199 = scmp.eq.s32.totalorder %s25, 1
      %p200 = scmp.ne.s32.totalorder %s195, %s197
      %p201 = scmp.eq.s32.totalorder %s25, 0
      %p202 = por %p200, %p201
      %p203 = scmp.ne.s32.totalorder %s195, %s197
      %p204 = scmp.eq.s32.totalorder %s30, 1
      %p205 = por %p203, %p204
      %p206 = scmp.ne.s32.totalorder %s197, %s198
      %p207 = scmp.eq.s32.totalorder %s30, 0
      %p208 = por %p206, %p207
      %p209 = scmp.ne.s32.totalorder %s197, %s198
      %p210 = scmp.eq.s32.totalorder %s31, 1
      %p211 = por %p209, %p210
      %p213 = scmp.ne.s32.totalorder %s198, %s212
      %p214 = scmp.eq.s32.totalorder %s31, 0
      %p215 = por %p213, %p214
      %s216 = ssub.s32 %s25, %s32
      %p217 = scmp.eq.s32.totalorder %s216, 0
      %s219 = sadd.s32 %s218, 1
      %s220 = scalar_select %p217, %s218, %s219
      %p223 = pneg %p217
      %p224 = scmp.eq.s32.totalorder %s25, 1
      %p225 = por %p223, %p224
      %p226 = scmp.ne.s32.totalorder %s218, %s221
      %p227 = scmp.eq.s32.totalorder %s25, 0
      %p228 = por %p226, %p227
      %p229 = scmp.ne.s32.totalorder %s218, %s221
      %p230 = scmp.eq.s32.totalorder %s30, 1
      %p231 = por %p229, %p230
      %p232 = scmp.ne.s32.totalorder %s221, %s222
      %p233 = scmp.eq.s32.totalorder %s30, 0
      %p234 = por %p232, %p233
      %p235 = scmp.ne.s32.totalorder %s221, %s222
      %p236 = scmp.eq.s32.totalorder %s31, 1
      %p237 = por %p235, %p236
      %p239 = scmp.ne.s32.totalorder %s222, %s238
      %p240 = scmp.eq.s32.totalorder %s31, 0
      %p241 = por %p239, %p240
      %p242 = scmp.le.s32.totalorder 1, %s25
      %p243 = scmp.lt.s32.totalorder %s25, 3
      %p244 = pnand %p242, %p243
      %p245 = pneg %p244
      // Predicated region
      $region9: #{tpu_custom_call.1} parent=5 // pred_check
        _
      $region10: #{tpu_custom_call.1} parent=5 // pred_check_branch
        %247 = sbr.rel (%p244) target = $region12
      $region11: #{tpu_custom_call.1} parent=5 // pred_region
        %s248 = ssub.s32 %s25, 1
        // Predicated region
        $region13: #{tpu_custom_call.1} parent=11 // pred_check
          %p249 = pneg %p124
        $region14: #{tpu_custom_call.1} parent=11 // pred_check_branch
          %251 = sbr.rel (%p249) target = $region16
        $region15: #{tpu_custom_call.1} parent=11 // pred_region
          %253 = vsyncadd [#allocation10], 0
          %s254 = sshll.u32 %s3, 4
          %s255 = int_to_ptr.hbm [resolvable:$true] %s254
          %s256 = sshll.u32 [#allocation9], 4
          %s257 = int_to_ptr.vmem [resolvable:$true] %s256
          %262 = dma.hbm_to_vmem [thread:$0]  %s255, 256, %s257, [#allocation10], 64, 64, 4
        $region16: #{tpu_custom_call.1} parent=11 // pred_fallthru
          _
        // Predicated region
        $region17: #{tpu_custom_call.1} parent=11 // pred_check
          %p263 = pneg %p145
        $region18: #{tpu_custom_call.1} parent=11 // pred_check_branch
          %265 = sbr.rel (%p263) target = $region20
        $region19: #{tpu_custom_call.1} parent=11 // pred_region
          %267 = vsyncadd [#allocation10], 0
          %s268 = sshll.u32 %s4, 4
          %s269 = int_to_ptr.hbm [resolvable:$true] %s268
          %s270 = sshll.u32 [#allocation11], 4
          %s271 = int_to_ptr.vmem [resolvable:$true] %s270
          %276 = dma.hbm_to_vmem [thread:$0]  %s269, 256, %s271, [#allocation10], 64, 64, 4
        $region20: #{tpu_custom_call.1} parent=11 // pred_fallthru
          _
        // Predicated region
        $region21: #{tpu_custom_call.1} parent=11 // pred_check
          %p277 = pneg %p166
        $region22: #{tpu_custom_call.1} parent=11 // pred_check_branch
          %279 = sbr.rel (%p277) target = $region24
        $region23: #{tpu_custom_call.1} parent=11 // pred_region
          %281 = vsyncadd [#allocation13], 0
          %s282 = sshll.u32 %s5, 4
          %s283 = int_to_ptr.hbm [resolvable:$true] %s282
          %s284 = sshll.u32 [#allocation12], 4
          %s285 = int_to_ptr.vmem [resolvable:$true] %s284
          %290 = dma.hbm_to_vmem [thread:$0]  %s283, 256, %s285, [#allocation13], 64, 64, 4
        $region24: #{tpu_custom_call.1} parent=11 // pred_fallthru
          _
        // Predicated region
        $region25: #{tpu_custom_call.1} parent=11 // pred_check
          %p291 = pneg %p187
        $region26: #{tpu_custom_call.1} parent=11 // pred_check_branch
          %293 = sbr.rel (%p291) target = $region28
        $region27: #{tpu_custom_call.1} parent=11 // pred_region
          %295 = vsyncadd [#allocation13], 0
          %s296 = sshll.u32 %s6, 4
          %s297 = int_to_ptr.hbm [resolvable:$true] %s296
          %s298 = sshll.u32 [#allocation14], 4
          %s299 = int_to_ptr.vmem [resolvable:$true] %s298
          %304 = dma.hbm_to_vmem [thread:$0]  %s297, 256, %s299, [#allocation13], 64, 64, 4
        $region28: #{tpu_custom_call.1} parent=11 // pred_fallthru
          _
        // Predicated region
        $region29: #{tpu_custom_call.1} parent=11 // pred_check
          %p305 = pneg %p208
        $region30: #{tpu_custom_call.1} parent=11 // pred_check_branch
          %307 = sbr.rel (%p305) target = $region32
        $region31: #{tpu_custom_call.1} parent=11 // pred_region
          _
        $region32: #{tpu_custom_call.1} parent=11 // pred_fallthru
          _
      $region12: #{tpu_custom_call.1} parent=5 // pred_fallthru
        _
      %p308 = scmp.lt.s32.totalorder %s25, 2
      // Predicated region
      $region33: #{tpu_custom_call.1} parent=5 // pred_check
        %p309 = pneg %p308
      $region34: #{tpu_custom_call.1} parent=5 // pred_check_branch
        %311 = sbr.rel (%p309) target = $region36
      $region35: #{tpu_custom_call.1} parent=5 // pred_region
        // Predicated region
        $region37: #{tpu_custom_call.1} parent=35 // pred_check
          %p312 = pneg %p45
        $region38: #{tpu_custom_call.1} parent=35 // pred_check_branch
          %314 = sbr.rel (%p312) target = $region40
        $region39: #{tpu_custom_call.1} parent=35 // pred_region
          %s315 = sand.u32 %s35, 1
          %s316 = scalar_lea.sflag [#allocation4], %s315
          %s317 = sand.u32 %s35, 1
          %s318 = smul.addr %s317, 8
          %s319 = scalar_lea.vmem [#allocation3], %s318
          %321 = vsyncadd %s316, 0
          %s322 = smul.addr %s25, 8
          %s323 = scalar_lea.hbm %s0, %s322
          %s325 = sshll.u32 %s323, 4
          %s326 = int_to_ptr.hbm [resolvable:$true] %s325
          %s327 = sshll.u32 %s319, 4
          %s328 = int_to_ptr.vmem [resolvable:$true] %s327
          %330 = dma.hbm_to_vmem [thread:$0]  %s326, 128, %s328, %s316
        $region40: #{tpu_custom_call.1} parent=35 // pred_fallthru
          _
        // Predicated region
        $region41: #{tpu_custom_call.1} parent=35 // pred_check
          %p331 = pneg %p71
        $region42: #{tpu_custom_call.1} parent=35 // pred_check_branch
          %333 = sbr.rel (%p331) target = $region44
        $region43: #{tpu_custom_call.1} parent=35 // pred_region
          %s334 = sand.u32 %s25, 1
          %s335 = scalar_lea.sflag [#allocation7], %s334
          %s336 = sand.u32 %s61, 1
          %s337 = smul.addr %s336, 8
          %s338 = scalar_lea.vmem [#allocation6], %s337
          %340 = vsyncadd %s335, 0
          %s341 = smul.addr %s25, 8
          %s342 = scalar_lea.hbm %s1, %s341
          %s344 = sshll.u32 %s342, 4
          %s345 = int_to_ptr.hbm [resolvable:$true] %s344
          %s346 = sshll.u32 %s338, 4
          %s347 = int_to_ptr.vmem [resolvable:$true] %s346
          %349 = dma.hbm_to_vmem [thread:$0]  %s345, 128, %s347, %s335
        $region44: #{tpu_custom_call.1} parent=35 // pred_fallthru
          _
        // Predicated region
        $region45: #{tpu_custom_call.1} parent=35 // pred_check
          %p350 = pneg %p97
        $region46: #{tpu_custom_call.1} parent=35 // pred_check_branch
          %352 = sbr.rel (%p350) target = $region48
        $region47: #{tpu_custom_call.1} parent=35 // pred_region
          %s353 = sand.u32 %s25, 1
          %s354 = scalar_lea.sflag [#allocation7], %s353
          %s355 = sand.u32 %s87, 1
          %s356 = smul.addr %s355, 8
          %s357 = scalar_lea.vmem [#allocation8], %s356
          %359 = vsyncadd %s354, 0
          %s360 = smul.addr %s25, 8
          %s361 = scalar_lea.hbm %s2, %s360
          %s363 = sshll.u32 %s361, 4
          %s364 = int_to_ptr.hbm [resolvable:$true] %s363
          %s365 = sshll.u32 %s357, 4
          %s366 = int_to_ptr.vmem [resolvable:$true] %s365
          %368 = dma.hbm_to_vmem [thread:$0]  %s364, 128, %s366, %s354
        $region48: #{tpu_custom_call.1} parent=35 // pred_fallthru
          _
      $region36: #{tpu_custom_call.1} parent=5 // pred_fallthru
        _
      %p369 = scmp.le.s32.totalorder 1, %s25
      %p370 = scmp.lt.s32.totalorder %s25, 3
      %p371 = pnand %p369, %p370
      %p372 = pneg %p371
      // Predicated region
      $region49: #{tpu_custom_call.1} parent=5 // pred_check
        _
      $region50: #{tpu_custom_call.1} parent=5 // pred_check_branch
        %374 = sbr.rel (%p371) target = $region52
      $region51: #{tpu_custom_call.1} parent=5 // pred_region
        %s375 = ssub.s32 %s25, 1
        %s376 = sand.u32 %s38, 1
        %s377 = scalar_lea.sflag [#allocation4], %s376
        %s378 = sand.u32 %s38, 1
        %s379 = smul.addr %s378, 8
        %s380 = scalar_lea.vmem [#allocation3], %s379
        // Predicated region
        $region53: #{tpu_custom_call.1} parent=51 // pred_check
          %p381 = pneg %p51
        $region54: #{tpu_custom_call.1} parent=51 // pred_check_branch
          %383 = sbr.rel (%p381) target = $region56
        $region55: #{tpu_custom_call.1} parent=51 // pred_region
          %385 = dma.done %s377, 128
        $region56: #{tpu_custom_call.1} parent=51 // pred_fallthru
          _
        %s386 = sand.u32 %s30, 1
        %s387 = scalar_lea.sflag [#allocation7], %s386
        %s388 = sand.u32 %s64, 1
        %s389 = smul.addr %s388, 8
        %s390 = scalar_lea.vmem [#allocation6], %s389
        // Predicated region
        $region57: #{tpu_custom_call.1} parent=51 // pred_check
          %p391 = pneg %p77
        $region58: #{tpu_custom_call.1} parent=51 // pred_check_branch
          %393 = sbr.rel (%p391) target = $region60
        $region59: #{tpu_custom_call.1} parent=51 // pred_region
          %395 = dma.done %s387, 128
        $region60: #{tpu_custom_call.1} parent=51 // pred_fallthru
          _
        %s396 = sand.u32 %s30, 1
        %s397 = scalar_lea.sflag [#allocation7], %s396
        %s398 = sand.u32 %s90, 1
        %s399 = smul.addr %s398, 8
        %s400 = scalar_lea.vmem [#allocation8], %s399
        // Predicated region
        $region61: #{tpu_custom_call.1} parent=51 // pred_check
          %p401 = pneg %p103
        $region62: #{tpu_custom_call.1} parent=51 // pred_check_branch
          %403 = sbr.rel (%p401) target = $region64
        $region63: #{tpu_custom_call.1} parent=51 // pred_region
          %405 = dma.done %s397, 128
        $region64: #{tpu_custom_call.1} parent=51 // pred_fallthru
          _
        // Predicated region
        $region65: #{tpu_custom_call.1} parent=51 // pred_check
          %p406 = pneg %p124
        $region66: #{tpu_custom_call.1} parent=51 // pred_check_branch
          %408 = sbr.rel (%p406) target = $region68
        $region67: #{tpu_custom_call.1} parent=51 // pred_region
          %410 = dma.done [#allocation10], 256
        $region68: #{tpu_custom_call.1} parent=51 // pred_fallthru
          _
        // Predicated region
        $region69: #{tpu_custom_call.1} parent=51 // pred_check
          %p411 = pneg %p145
        $region70: #{tpu_custom_call.1} parent=51 // pred_check_branch
          %413 = sbr.rel (%p411) target = $region72
        $region71: #{tpu_custom_call.1} parent=51 // pred_region
          %415 = dma.done [#allocation10], 256
        $region72: #{tpu_custom_call.1} parent=51 // pred_fallthru
          _
        // Predicated region
        $region73: #{tpu_custom_call.1} parent=51 // pred_check
          %p416 = pneg %p166
        $region74: #{tpu_custom_call.1} parent=51 // pred_check_branch
          %418 = sbr.rel (%p416) target = $region76
        $region75: #{tpu_custom_call.1} parent=51 // pred_region
          %420 = dma.done [#allocation13], 256
        $region76: #{tpu_custom_call.1} parent=51 // pred_fallthru
          _
        // Predicated region
        $region77: #{tpu_custom_call.1} parent=51 // pred_check
          %p421 = pneg %p187
        $region78: #{tpu_custom_call.1} parent=51 // pred_check_branch
          %423 = sbr.rel (%p421) target = $region80
        $region79: #{tpu_custom_call.1} parent=51 // pred_region
          %425 = dma.done [#allocation13], 256
        $region80: #{tpu_custom_call.1} parent=51 // pred_fallthru
          _
        %s426 = sand.u32 %s38, 1
        %s427 = scalar_lea.sflag [#allocation4], %s426
        %s428 = sand.u32 %s38, 1
        %s429 = smul.addr %s428, 8
        %s430 = scalar_lea.vmem [#allocation3], %s429
        %p431 = pneg %p51
        %p432 = pneg %p48
        %s433 = sand.u32 %s30, 1
        %s434 = scalar_lea.sflag [#allocation7], %s433
        %s435 = sand.u32 %s64, 1
        %s436 = smul.addr %s435, 8
        %s437 = scalar_lea.vmem [#allocation6], %s436
        %p438 = pneg %p77
        %p439 = pneg %p74
        %s440 = sand.u32 %s30, 1
        %s441 = scalar_lea.sflag [#allocation7], %s440
        %s442 = sand.u32 %s90, 1
        %s443 = smul.addr %s442, 8
        %s444 = scalar_lea.vmem [#allocation8], %s443
        %p445 = pneg %p103
        %p446 = pneg %p100
        %p447 = pneg %p124
        %p448 = pneg %p121
        %p449 = pneg %p145
        %p450 = pneg %p142
        %p451 = pneg %p166
        %p452 = pneg %p163
        %p453 = pneg %p187
        %p454 = pneg %p184
        %p455 = pneg %p208
        %p456 = pneg %p205
        %p457 = pneg %p234
        %p458 = pneg %p231
        %s459 = sand.u32 %s221, 1
        %s460 = scalar_lea.sflag [#allocation5], %s459
        %s461 = sand.u32 %s221, 1
        %s462 = smul.addr %s461, 8
        %s463 = scalar_lea.vmem [#allocation15], %s462
        %v465 = vld [vmem:[%s380] sm:$0xff]
        %v466 = vpack.c.bf16 %v465, %v465
        %v467 = vld [vmem:[%s390] sm:$0xff]
        %v468 = vpack.c.bf16 %v467, %v467
        %v469 = vld [vmem:[%s400] sm:$0xff]
        %v470 = vpack.c.bf16 %v469, %v469
        %v471 = vld [vmem:[#allocation9] sm:$0xf]
        %v472 = vld [vmem:[#allocation9 + $0x4] sm:$0xf]
        %v473 = vld [vmem:[#allocation9 + $0x8] sm:$0xf]
        %v474 = vld [vmem:[#allocation9 + $0xc] sm:$0xf]
        %v475 = vld [vmem:[#allocation11] sm:$0xf]
        %v476 = vld [vmem:[#allocation11 + $0x4] sm:$0xf]
        %v477 = vld [vmem:[#allocation11 + $0x8] sm:$0xf]
        %v478 = vld [vmem:[#allocation11 + $0xc] sm:$0xf]
        %v479 = vld [vmem:[#allocation12] sm:$0xf]
        %v480 = vld [vmem:[#allocation12 + $0x4] sm:$0xf]
        %v481 = vld [vmem:[#allocation12 + $0x8] sm:$0xf]
        %v482 = vld [vmem:[#allocation12 + $0xc] sm:$0xf]
        %v483 = vld [vmem:[#allocation14] sm:$0xf]
        %v484 = vld [vmem:[#allocation14 + $0x4] sm:$0xf]
        %v485 = vld [vmem:[#allocation14 + $0x8] sm:$0xf]
        %v486 = vld [vmem:[#allocation14 + $0xc] sm:$0xf]
        %v491 = vunpack.c.l.b16 %v471
        %v492 = vunpack.c.l.b16 %v472
        %v493 = vunpack.c.l.b16 %v473
        %v494 = vunpack.c.l.b16 %v474
        %v495 = vpack.c.b16 %v492, %v491
        %v496 = vpack.c.b16 %v494, %v493
        %vm497 = vcmask 261120
        %v499 = vsel %vm497, %v466, 0
        %v502 = vsel %vm497, %v495, 0
        %v505 = vsel %vm497, %v496, 0
        %507 = vmatpush.bf16.xpose.msra.mxu0 0
        %508 = vmatpush.bf16.xpose.msra.mxu0 0
        %509 = vmatpush.bf16.xpose.msra.mxu0 0
        %510 = vmatpush.bf16.xpose.msra.mxu0 0
        %511 = vmatpush.bf16.xpose.msra.mxu0 0
        %512 = vmatpush.bf16.xpose.msra.mxu0 0
        %513 = vmatpush.bf16.xpose.msra.mxu0 %v505
        %514 = vmatpush.bf16.xpose.msra.mxu0 %v502
        %515 = vmatmul.bf16.gmra.mxu0 %v499
        %v516 = vpop.f32.mrf.mxu0
        %v517 = vadd.f32 0.0, %v516
        %v518 = vpop.f32.mrf.mxu0
        %519 = vdwg.mxu0
        %v524 = vunpack.c.l.b16 %v475
        %v525 = vunpack.c.l.b16 %v476
        %v526 = vunpack.c.l.b16 %v477
        %v527 = vunpack.c.l.b16 %v478
        %v528 = vpack.c.b16 %v525, %v524
        %v529 = vpack.c.b16 %v527, %v526
        %v531 = vsel %vm497, %v468, 0
        %v534 = vsel %vm497, %v528, 0
        %v537 = vsel %vm497, %v529, 0
        %539 = vmatpush.bf16.xpose.msra.mxu0 0
        %540 = vmatpush.bf16.xpose.msra.mxu0 0
        %541 = vmatpush.bf16.xpose.msra.mxu0 0
        %542 = vmatpush.bf16.xpose.msra.mxu0 0
        %543 = vmatpush.bf16.xpose.msra.mxu0 0
        %544 = vmatpush.bf16.xpose.msra.mxu0 0
        %545 = vmatpush.bf16.xpose.msra.mxu0 %v537
        %546 = vmatpush.bf16.xpose.msra.mxu0 %v534
        %547 = vmatmul.bf16.gmra.mxu0 %v531
        %v548 = vpop.f32.mrf.mxu0
        %v549 = vadd.f32 0.0, %v548
        %v550 = vpop.f32.mrf.mxu0
        %551 = vdwg.mxu0
        %v556 = vunpack.c.l.b16 %v479
        %v557 = vunpack.c.l.b16 %v480
        %v558 = vunpack.c.l.b16 %v481
        %v559 = vunpack.c.l.b16 %v482
        %v560 = vpack.c.b16 %v557, %v556
        %v561 = vpack.c.b16 %v559, %v558
        %v563 = vsel %vm497, %v470, 0
        %v566 = vsel %vm497, %v560, 0
        %v569 = vsel %vm497, %v561, 0
        %571 = vmatpush.bf16.xpose.msra.mxu0 0
        %572 = vmatpush.bf16.xpose.msra.mxu0 0
        %573 = vmatpush.bf16.xpose.msra.mxu0 0
        %574 = vmatpush.bf16.xpose.msra.mxu0 0
        %575 = vmatpush.bf16.xpose.msra.mxu0 0
        %576 = vmatpush.bf16.xpose.msra.mxu0 0
        %577 = vmatpush.bf16.xpose.msra.mxu0 %v569
        %578 = vmatpush.bf16.xpose.msra.mxu0 %v566
        %579 = vmatmul.bf16.gmra.mxu0 %v563
        %v580 = vpop.f32.mrf.mxu0
        %v581 = vadd.f32 0.0, %v580
        %v582 = vpop.f32.mrf.mxu0
        %583 = vdwg.mxu0
        %v584 = vmul.f32 %v517, 0.5
        %v585 = vpack.c.bf16 %v584, %v584
        %v586 = vpack.c.bf16 %v549, %v549
        %v587 = vpack.c.bf16 %v581, %v581
        %vm588 = vcmask 31744
        %v590 = vsel %vm588, %v585, 0
        %v593 = vsel %vm588, %v586, 0
        %595 = vmatpush.bf16.xpose.msra.mxu0 0
        %596 = vmatpush.bf16.xpose.msra.mxu0 0
        %597 = vmatpush.bf16.xpose.msra.mxu0 0
        %598 = vmatpush.bf16.xpose.msra.mxu0 0
        %599 = vmatpush.bf16.xpose.msra.mxu0 0
        %600 = vmatpush.bf16.xpose.msra.mxu0 0
        %601 = vmatpush.bf16.xpose.msra.mxu0 0
        %602 = vmatpush.bf16.xpose.msra.mxu0 %v593
        %603 = vmatmul.bf16.gmra.mxu0 %v590
        %v604 = vpop.f32.mrf.mxu0
        %v605 = vadd.f32 0.0, %v604
        %v606 = vpop.f32.mrf.mxu0
        %607 = vdwg.mxu0
        %vm608 = vcmask 64512
        %v609 = vsel %vm608, %v605, -inf
        %610 = vmax.xlane.f32.xlu0 %v609
        %v611 = vpop.xlane.xlu0 %610
        %v612 = vsub.f32 %v605, %v611
        %v613 = vmul.f32 %v612, 1.442695
        %v614 = vpow.pop %v613
        %v615 = vsel %vm608, %v614, 0.0
        %616 = vadd.xlane.f32.xlu0 %v615
        %v617 = vpop.xlane.xlu0 %616
        %v618 = vrcp.pop %v617
        %v619 = vmul.f32 %v614, %v618
        %v620 = vpack.c.bf16 %v619, %v619
        %v622 = vsel %vm608, %v620, 0
        %vm624 = vcmask 1043456
        %v626 = vsel %vm624, %v587, 0
        %628 = vmatpush.bf16.msra.mxu0 0
        %629 = vmatpush.bf16.msra.mxu0 0
        %630 = vmatpush.bf16.msra.mxu0 0
        %631 = vmatpush.bf16.msra.mxu0 0
        %632 = vmatpush.bf16.msra.mxu0 0
        %633 = vmatpush.bf16.msra.mxu0 0
        %634 = vmatpush.bf16.msra.mxu0 0
        %635 = vmatpush.bf16.msra.mxu0 %v626
        %636 = vmatmul.bf16.gmra.mxu0 %v622
        %v637 = vpop.f32.mrf.mxu0
        %v638 = vadd.f32 0.0, %v637
        %v639 = vpop.f32.mrf.mxu0
        %640 = vdwg.mxu0
        %641 = vst.msk [vmem:[#allocation2] sm:$0xff] %vm588, %v638
        %v643 = vunpack.c.l.b16 %v585
        %v644 = vpack.c.b16 %v643, %v643
        %645 = vrot.lane.b32.xlu0 %v644, 124
        %v646 = vpop.permute.xlu0 %645
        %v648 = vunpack.c.l.b16 %v586
        %v649 = vpack.c.b16 %v648, %v648
        %650 = vrot.lane.b32.xlu0 %v649, 124
        %v651 = vpop.permute.xlu0 %650
        %v653 = vsel %vm588, %v646, 0
        %v656 = vsel %vm588, %v651, 0
        %658 = vmatpush.bf16.xpose.msra.mxu0 0
        %659 = vmatpush.bf16.xpose.msra.mxu0 0
        %660 = vmatpush.bf16.xpose.msra.mxu0 0
        %661 = vmatpush.bf16.xpose.msra.mxu0 0
        %662 = vmatpush.bf16.xpose.msra.mxu0 0
        %663 = vmatpush.bf16.xpose.msra.mxu0 0
        %664 = vmatpush.bf16.xpose.msra.mxu0 0
        %665 = vmatpush.bf16.xpose.msra.mxu0 %v656
        %666 = vmatmul.bf16.gmra.mxu0 %v653
        %v667 = vpop.f32.mrf.mxu0
        %v668 = vadd.f32 0.0, %v667
        %v669 = vpop.f32.mrf.mxu0
        %670 = vdwg.mxu0
        %v671 = vsel %vm608, %v668, -inf
        %672 = vmax.xlane.f32.xlu0 %v671
        %v673 = vpop.xlane.xlu0 %672
        %v674 = vsub.f32 %v668, %v673
        %v675 = vmul.f32 %v674, 1.442695
        %v676 = vpow.pop %v675
        %v677 = vsel %vm608, %v676, 0.0
        %678 = vadd.xlane.f32.xlu0 %v677
        %v679 = vpop.xlane.xlu0 %678
        %v680 = vrcp.pop %v679
        %v681 = vmul.f32 %v676, %v680
        %v682 = vpack.c.bf16 %v681, %v681
        %v684 = vunpack.c.l.b16 %v587
        %v685 = vpack.c.b16 %v684, %v684
        %686 = vrot.lane.b32.xlu0 %v685, 124
        %v687 = vpop.permute.xlu0 %686
        %v689 = vsel %vm608, %v682, 0
        %v692 = vsel %vm624, %v687, 0
        %694 = vmatpush.bf16.msra.mxu0 0
        %695 = vmatpush.bf16.msra.mxu0 0
        %696 = vmatpush.bf16.msra.mxu0 0
        %697 = vmatpush.bf16.msra.mxu0 0
        %698 = vmatpush.bf16.msra.mxu0 0
        %699 = vmatpush.bf16.msra.mxu0 0
        %700 = vmatpush.bf16.msra.mxu0 0
        %701 = vmatpush.bf16.msra.mxu0 %v692
        %702 = vmatmul.bf16.gmra.mxu0 %v689
        %v703 = vpop.f32.mrf.mxu0
        %v704 = vadd.f32 0.0, %v703
        %v705 = vpop.f32.mrf.mxu0
        %706 = vdwg.mxu0
        %708 = vrot.lane.b32.xlu0 %v704, 4
        %v709 = vpop.permute.xlu0 %708
        %vm711 = vcmask 64544
        %712 = vst.msk [vmem:[#allocation2] sm:$0xff] %vm711, %v709
        %713 = vrot.lane.b32.xlu0 %v644, 120
        %v714 = vpop.permute.xlu0 %713
        %715 = vrot.lane.b32.xlu0 %v649, 120
        %v716 = vpop.permute.xlu0 %715
        %v718 = vsel %vm588, %v714, 0
        %v721 = vsel %vm588, %v716, 0
        %723 = vmatpush.bf16.xpose.msra.mxu0 0
        %724 = vmatpush.bf16.xpose.msra.mxu0 0
        %725 = vmatpush.bf16.xpose.msra.mxu0 0
        %726 = vmatpush.bf16.xpose.msra.mxu0 0
        %727 = vmatpush.bf16.xpose.msra.mxu0 0
        %728 = vmatpush.bf16.xpose.msra.mxu0 0
        %729 = vmatpush.bf16.xpose.msra.mxu0 0
        %730 = vmatpush.bf16.xpose.msra.mxu0 %v721
        %731 = vmatmul.bf16.gmra.mxu0 %v718
        %v732 = vpop.f32.mrf.mxu0
        %v733 = vadd.f32 0.0, %v732
        %v734 = vpop.f32.mrf.mxu0
        %735 = vdwg.mxu0
        %v736 = vsel %vm608, %v733, -inf
        %737 = vmax.xlane.f32.xlu0 %v736
        %v738 = vpop.xlane.xlu0 %737
        %v739 = vsub.f32 %v733, %v738
        %v740 = vmul.f32 %v739, 1.442695
        %v741 = vpow.pop %v740
        %v742 = vsel %vm608, %v741, 0.0
        %743 = vadd.xlane.f32.xlu0 %v742
        %v744 = vpop.xlane.xlu0 %743
        %v745 = vrcp.pop %v744
        %v746 = vmul.f32 %v741, %v745
        %v747 = vpack.c.bf16 %v746, %v746
        %748 = vrot.lane.b32.xlu0 %v685, 120
        %v749 = vpop.permute.xlu0 %748
        %v751 = vsel %vm608, %v747, 0
        %v754 = vsel %vm624, %v749, 0
        %756 = vmatpush.bf16.msra.mxu0 0
        %757 = vmatpush.bf16.msra.mxu0 0
        %758 = vmatpush.bf16.msra.mxu0 0
        %759 = vmatpush.bf16.msra.mxu0 0
        %760 = vmatpush.bf16.msra.mxu0 0
        %761 = vmatpush.bf16.msra.mxu0 0
        %762 = vmatpush.bf16.msra.mxu0 0
        %763 = vmatpush.bf16.msra.mxu0 %v754
        %764 = vmatmul.bf16.gmra.mxu0 %v751
        %v765 = vpop.f32.mrf.mxu0
        %v766 = vadd.f32 0.0, %v765
        %v767 = vpop.f32.mrf.mxu0
        %768 = vdwg.mxu0
        %770 = vrot.lane.b32.xlu0 %v766, 8
        %v771 = vpop.permute.xlu0 %770
        %vm773 = vcmask 97344
        %774 = vst.msk [vmem:[#allocation2] sm:$0xff] %vm773, %v771
        %775 = vrot.lane.b32.xlu0 %v644, 116
        %v776 = vpop.permute.xlu0 %775
        %777 = vrot.lane.b32.xlu0 %v649, 116
        %v778 = vpop.permute.xlu0 %777
        %v780 = vsel %vm588, %v776, 0
        %v783 = vsel %vm588, %v778, 0
        %785 = vmatpush.bf16.xpose.msra.mxu0 0
        %786 = vmatpush.bf16.xpose.msra.mxu0 0
        %787 = vmatpush.bf16.xpose.msra.mxu0 0
        %788 = vmatpush.bf16.xpose.msra.mxu0 0
        %789 = vmatpush.bf16.xpose.msra.mxu0 0
        %790 = vmatpush.bf16.xpose.msra.mxu0 0
        %791 = vmatpush.bf16.xpose.msra.mxu0 0
        %792 = vmatpush.bf16.xpose.msra.mxu0 %v783
        %793 = vmatmul.bf16.gmra.mxu0 %v780
        %v794 = vpop.f32.mrf.mxu0
        %v795 = vadd.f32 0.0, %v794
        %v796 = vpop.f32.mrf.mxu0
        %797 = vdwg.mxu0
        %v798 = vsel %vm608, %v795, -inf
        %799 = vmax.xlane.f32.xlu0 %v798
        %v800 = vpop.xlane.xlu0 %799
        %v801 = vsub.f32 %v795, %v800
        %v802 = vmul.f32 %v801, 1.442695
        %v803 = vpow.pop %v802
        %v804 = vsel %vm608, %v803, 0.0
        %805 = vadd.xlane.f32.xlu0 %v804
        %v806 = vpop.xlane.xlu0 %805
        %v807 = vrcp.pop %v806
        %v808 = vmul.f32 %v803, %v807
        %v809 = vpack.c.bf16 %v808, %v808
        %810 = vrot.lane.b32.xlu0 %v685, 116
        %v811 = vpop.permute.xlu0 %810
        %v813 = vsel %vm608, %v809, 0
        %v816 = vsel %vm624, %v811, 0
        %818 = vmatpush.bf16.msra.mxu0 0
        %819 = vmatpush.bf16.msra.mxu0 0
        %820 = vmatpush.bf16.msra.mxu0 0
        %821 = vmatpush.bf16.msra.mxu0 0
        %822 = vmatpush.bf16.msra.mxu0 0
        %823 = vmatpush.bf16.msra.mxu0 0
        %824 = vmatpush.bf16.msra.mxu0 0
        %825 = vmatpush.bf16.msra.mxu0 %v816
        %826 = vmatmul.bf16.gmra.mxu0 %v813
        %v827 = vpop.f32.mrf.mxu0
        %v828 = vadd.f32 0.0, %v827
        %v829 = vpop.f32.mrf.mxu0
        %830 = vdwg.mxu0
        %832 = vrot.lane.b32.xlu0 %v828, 12
        %v833 = vpop.permute.xlu0 %832
        %vm835 = vcmask 130144
        %836 = vst.msk [vmem:[#allocation2] sm:$0xff] %vm835, %v833
        %837 = vrot.lane.b32.xlu0 %v644, 112
        %v838 = vpop.permute.xlu0 %837
        %839 = vrot.lane.b32.xlu0 %v649, 112
        %v840 = vpop.permute.xlu0 %839
        %v842 = vsel %vm588, %v838, 0
        %v845 = vsel %vm588, %v840, 0
        %847 = vmatpush.bf16.xpose.msra.mxu0 0
        %848 = vmatpush.bf16.xpose.msra.mxu0 0
        %849 = vmatpush.bf16.xpose.msra.mxu0 0
        %850 = vmatpush.bf16.xpose.msra.mxu0 0
        %851 = vmatpush.bf16.xpose.msra.mxu0 0
        %852 = vmatpush.bf16.xpose.msra.mxu0 0
        %853 = vmatpush.bf16.xpose.msra.mxu0 0
        %854 = vmatpush.bf16.xpose.msra.mxu0 %v845
        %855 = vmatmul.bf16.gmra.mxu0 %v842
        %v856 = vpop.f32.mrf.mxu0
        %v857 = vadd.f32 0.0, %v856
        %v858 = vpop.f32.mrf.mxu0
        %859 = vdwg.mxu0
        %v860 = vsel %vm608, %v857, -inf
        %861 = vmax.xlane.f32.xlu0 %v860
        %v862 = vpop.xlane.xlu0 %861
        %v863 = vsub.f32 %v857, %v862
        %v864 = vmul.f32 %v863, 1.442695
        %v865 = vpow.pop %v864
        %v866 = vsel %vm608, %v865, 0.0
        %867 = vadd.xlane.f32.xlu0 %v866
        %v868 = vpop.xlane.xlu0 %867
        %v869 = vrcp.pop %v868
        %v870 = vmul.f32 %v865, %v869
        %v871 = vpack.c.bf16 %v870, %v870
        %872 = vrot.lane.b32.xlu0 %v685, 112
        %v873 = vpop.permute.xlu0 %872
        %v875 = vsel %vm608, %v871, 0
        %v878 = vsel %vm624, %v873, 0
        %880 = vmatpush.bf16.msra.mxu0 0
        %881 = vmatpush.bf16.msra.mxu0 0
        %882 = vmatpush.bf16.msra.mxu0 0
        %883 = vmatpush.bf16.msra.mxu0 0
        %884 = vmatpush.bf16.msra.mxu0 0
        %885 = vmatpush.bf16.msra.mxu0 0
        %886 = vmatpush.bf16.msra.mxu0 0
        %887 = vmatpush.bf16.msra.mxu0 %v878
        %888 = vmatmul.bf16.gmra.mxu0 %v875
        %v889 = vpop.f32.mrf.mxu0
        %v890 = vadd.f32 0.0, %v889
        %v891 = vpop.f32.mrf.mxu0
        %892 = vdwg.mxu0
        %894 = vrot.lane.b32.xlu0 %v890, 16
        %v895 = vpop.permute.xlu0 %894
        %vm897 = vcmask 162944
        %898 = vst.msk [vmem:[#allocation2] sm:$0xff] %vm897, %v895
        %899 = vrot.lane.b32.xlu0 %v644, 108
        %v900 = vpop.permute.xlu0 %899
        %901 = vrot.lane.b32.xlu0 %v649, 108
        %v902 = vpop.permute.xlu0 %901
        %v904 = vsel %vm588, %v900, 0
        %v907 = vsel %vm588, %v902, 0
        %909 = vmatpush.bf16.xpose.msra.mxu0 0
        %910 = vmatpush.bf16.xpose.msra.mxu0 0
        %911 = vmatpush.bf16.xpose.msra.mxu0 0
        %912 = vmatpush.bf16.xpose.msra.mxu0 0
        %913 = vmatpush.bf16.xpose.msra.mxu0 0
        %914 = vmatpush.bf16.xpose.msra.mxu0 0
        %915 = vmatpush.bf16.xpose.msra.mxu0 0
        %916 = vmatpush.bf16.xpose.msra.mxu0 %v907
        %917 = vmatmul.bf16.gmra.mxu0 %v904
        %v918 = vpop.f32.mrf.mxu0
        %v919 = vadd.f32 0.0, %v918
        %v920 = vpop.f32.mrf.mxu0
        %921 = vdwg.mxu0
        %v922 = vsel %vm608, %v919, -inf
        %923 = vmax.xlane.f32.xlu0 %v922
        %v924 = vpop.xlane.xlu0 %923
        %v925 = vsub.f32 %v919, %v924
        %v926 = vmul.f32 %v925, 1.442695
        %v927 = vpow.pop %v926
        %v928 = vsel %vm608, %v927, 0.0
        %929 = vadd.xlane.f32.xlu0 %v928
        %v930 = vpop.xlane.xlu0 %929
        %v931 = vrcp.pop %v930
        %v932 = vmul.f32 %v927, %v931
        %v933 = vpack.c.bf16 %v932, %v932
        %934 = vrot.lane.b32.xlu0 %v685, 108
        %v935 = vpop.permute.xlu0 %934
        %v937 = vsel %vm608, %v933, 0
        %v940 = vsel %vm624, %v935, 0
        %942 = vmatpush.bf16.msra.mxu0 0
        %943 = vmatpush.bf16.msra.mxu0 0
        %944 = vmatpush.bf16.msra.mxu0 0
        %945 = vmatpush.bf16.msra.mxu0 0
        %946 = vmatpush.bf16.msra.mxu0 0
        %947 = vmatpush.bf16.msra.mxu0 0
        %948 = vmatpush.bf16.msra.mxu0 0
        %949 = vmatpush.bf16.msra.mxu0 %v940
        %950 = vmatmul.bf16.gmra.mxu0 %v937
        %v951 = vpop.f32.mrf.mxu0
        %v952 = vadd.f32 0.0, %v951
        %v953 = vpop.f32.mrf.mxu0
        %954 = vdwg.mxu0
        %956 = vrot.lane.b32.xlu0 %v952, 20
        %v957 = vpop.permute.xlu0 %956
        %vm959 = vcmask 195744
        %960 = vst.msk [vmem:[#allocation2] sm:$0xff] %vm959, %v957
        %961 = vrot.lane.b32.xlu0 %v644, 104
        %v962 = vpop.permute.xlu0 %961
        %963 = vrot.lane.b32.xlu0 %v649, 104
        %v964 = vpop.permute.xlu0 %963
        %v966 = vsel %vm588, %v962, 0
        %v969 = vsel %vm588, %v964, 0
        %971 = vmatpush.bf16.xpose.msra.mxu0 0
        %972 = vmatpush.bf16.xpose.msra.mxu0 0
        %973 = vmatpush.bf16.xpose.msra.mxu0 0
        %974 = vmatpush.bf16.xpose.msra.mxu0 0
        %975 = vmatpush.bf16.xpose.msra.mxu0 0
        %976 = vmatpush.bf16.xpose.msra.mxu0 0
        %977 = vmatpush.bf16.xpose.msra.mxu0 0
        %978 = vmatpush.bf16.xpose.msra.mxu0 %v969
        %979 = vmatmul.bf16.gmra.mxu0 %v966
        %v980 = vpop.f32.mrf.mxu0
        %v981 = vadd.f32 0.0, %v980
        %v982 = vpop.f32.mrf.mxu0
        %983 = vdwg.mxu0
        %v984 = vsel %vm608, %v981, -inf
        %985 = vmax.xlane.f32.xlu0 %v984
        %v986 = vpop.xlane.xlu0 %985
        %v987 = vsub.f32 %v981, %v986
        %v988 = vmul.f32 %v987, 1.442695
        %v989 = vpow.pop %v988
        %v990 = vsel %vm608, %v989, 0.0
        %991 = vadd.xlane.f32.xlu0 %v990
        %v992 = vpop.xlane.xlu0 %991
        %v993 = vrcp.pop %v992
        %v994 = vmul.f32 %v989, %v993
        %v995 = vpack.c.bf16 %v994, %v994
        %996 = vrot.lane.b32.xlu0 %v685, 104
        %v997 = vpop.permute.xlu0 %996
        %v999 = vsel %vm608, %v995, 0
        %v1002 = vsel %vm624, %v997, 0
        %1004 = vmatpush.bf16.msra.mxu0 0
        %1005 = vmatpush.bf16.msra.mxu0 0
        %1006 = vmatpush.bf16.msra.mxu0 0
        %1007 = vmatpush.bf16.msra.mxu0 0
        %1008 = vmatpush.bf16.msra.mxu0 0
        %1009 = vmatpush.bf16.msra.mxu0 0
        %1010 = vmatpush.bf16.msra.mxu0 0
        %1011 = vmatpush.bf16.msra.mxu0 %v1002
        %1012 = vmatmul.bf16.gmra.mxu0 %v999
        %v1013 = vpop.f32.mrf.mxu0
        %v1014 = vadd.f32 0.0, %v1013
        %v1015 = vpop.f32.mrf.mxu0
        %1016 = vdwg.mxu0
        %1018 = vrot.lane.b32.xlu0 %v1014, 24
        %v1019 = vpop.permute.xlu0 %1018
        %vm1021 = vcmask 228544
        %1022 = vst.msk [vmem:[#allocation2] sm:$0xff] %vm1021, %v1019
        %1023 = vrot.lane.b32.xlu0 %v644, 100
        %v1024 = vpop.permute.xlu0 %1023
        %1025 = vrot.lane.b32.xlu0 %v649, 100
        %v1026 = vpop.permute.xlu0 %1025
        %v1028 = vsel %vm588, %v1024, 0
        %v1031 = vsel %vm588, %v1026, 0
        %1033 = vmatpush.bf16.xpose.msra.mxu0 0
        %1034 = vmatpush.bf16.xpose.msra.mxu0 0
        %1035 = vmatpush.bf16.xpose.msra.mxu0 0
        %1036 = vmatpush.bf16.xpose.msra.mxu0 0
        %1037 = vmatpush.bf16.xpose.msra.mxu0 0
        %1038 = vmatpush.bf16.xpose.msra.mxu0 0
        %1039 = vmatpush.bf16.xpose.msra.mxu0 0
        %1040 = vmatpush.bf16.xpose.msra.mxu0 %v1031
        %1041 = vmatmul.bf16.gmra.mxu0 %v1028
        %v1042 = vpop.f32.mrf.mxu0
        %v1043 = vadd.f32 0.0, %v1042
        %v1044 = vpop.f32.mrf.mxu0
        %1045 = vdwg.mxu0
        %v1046 = vsel %vm608, %v1043, -inf
        %1047 = vmax.xlane.f32.xlu0 %v1046
        %v1048 = vpop.xlane.xlu0 %1047
        %v1049 = vsub.f32 %v1043, %v1048
        %v1050 = vmul.f32 %v1049, 1.442695
        %v1051 = vpow.pop %v1050
        %v1052 = vsel %vm608, %v1051, 0.0
        %1053 = vadd.xlane.f32.xlu0 %v1052
        %v1054 = vpop.xlane.xlu0 %1053
        %v1055 = vrcp.pop %v1054
        %v1056 = vmul.f32 %v1051, %v1055
        %v1057 = vpack.c.bf16 %v1056, %v1056
        %1058 = vrot.lane.b32.xlu0 %v685, 100
        %v1059 = vpop.permute.xlu0 %1058
        %v1061 = vsel %vm608, %v1057, 0
        %v1064 = vsel %vm624, %v1059, 0
        %1066 = vmatpush.bf16.msra.mxu0 0
        %1067 = vmatpush.bf16.msra.mxu0 0
        %1068 = vmatpush.bf16.msra.mxu0 0
        %1069 = vmatpush.bf16.msra.mxu0 0
        %1070 = vmatpush.bf16.msra.mxu0 0
        %1071 = vmatpush.bf16.msra.mxu0 0
        %1072 = vmatpush.bf16.msra.mxu0 0
        %1073 = vmatpush.bf16.msra.mxu0 %v1064
        %1074 = vmatmul.bf16.gmra.mxu0 %v1061
        %v1075 = vpop.f32.mrf.mxu0
        %v1076 = vadd.f32 0.0, %v1075
        %v1077 = vpop.f32.mrf.mxu0
        %1078 = vdwg.mxu0
        %1080 = vrot.lane.b32.xlu0 %v1076, 28
        %v1081 = vpop.permute.xlu0 %1080
        %vm1083 = vcmask 261344
        %1084 = vst.msk [vmem:[#allocation2] sm:$0xff] %vm1083, %v1081
        %v1085 = vld [vmem:[#allocation2] sm:$0xff]
        %v1086 = vpack.c.bf16 %v1085, %v1085
        %v1087 = vld [vmem:[%s7] sm:$0x1]
        %v1089 = vperm.slane %v1087, 0
        %v1095 = vunpack.c.l.b16 %v483
        %v1096 = vunpack.c.l.b16 %v484
        %v1097 = vunpack.c.l.b16 %v485
        %v1098 = vunpack.c.l.b16 %v486
        %v1099 = vpack.c.b16 %v1096, %v1095
        %v1100 = vpack.c.b16 %v1098, %v1097
        %v1102 = vsel %vm497, %v1086, 0
        %v1105 = vsel %vm497, %v1099, 0
        %v1108 = vsel %vm497, %v1100, 0
        %1110 = vmatpush.bf16.xpose.msra.mxu0 0
        %1111 = vmatpush.bf16.xpose.msra.mxu0 0
        %1112 = vmatpush.bf16.xpose.msra.mxu0 0
        %1113 = vmatpush.bf16.xpose.msra.mxu0 0
        %1114 = vmatpush.bf16.xpose.msra.mxu0 0
        %1115 = vmatpush.bf16.xpose.msra.mxu0 0
        %1116 = vmatpush.bf16.xpose.msra.mxu0 %v1108
        %1117 = vmatpush.bf16.xpose.msra.mxu0 %v1105
        %1118 = vmatmul.bf16.gmra.mxu0 %v1102
        %v1119 = vpop.f32.mrf.mxu0
        %v1120 = vadd.f32 %v1089, %v1119
        %v1121 = vpop.f32.mrf.mxu0
        %1122 = vdwg.mxu0
        %1123 = vst.msk [vmem:[%s463] sm:$0xff] %vm497, %v1120
        %s1124 = sand.u32 %s221, 1
        %s1125 = scalar_lea.sflag [#allocation5], %s1124
        %s1126 = sand.u32 %s221, 1
        %s1127 = smul.addr %s1126, 8
        %s1128 = scalar_lea.vmem [#allocation15], %s1127
        // Predicated region
        $region81: #{tpu_custom_call.1} parent=51 // pred_check
          %p1129 = pneg %p231
        $region82: #{tpu_custom_call.1} parent=51 // pred_check_branch
          %1131 = sbr.rel (%p1129) target = $region84
        $region83: #{tpu_custom_call.1} parent=51 // pred_region
          %1133 = vsyncadd %s1125, 0
          %s1134 = smul.addr %s30, 8
          %s1135 = scalar_lea.hbm %s8, %s1134
          %s1137 = sshll.u32 %s1128, 4
          %s1138 = int_to_ptr.vmem [resolvable:$true] %s1137
          %s1139 = sshll.u32 %s1135, 4
          %s1140 = int_to_ptr.hbm [resolvable:$true] %s1139
          %1142 = dma.vmem_to_hbm [thread:$0]  %s1138, 128, %s1140, %s1125
        $region84: #{tpu_custom_call.1} parent=51 // pred_fallthru
          _
      $region52: #{tpu_custom_call.1} parent=5 // pred_fallthru
        _
      %p1143 = scmp.le.s32.totalorder 2, %s25
      // Predicated region
      $region85: #{tpu_custom_call.1} parent=5 // pred_check
        %p1144 = pneg %p1143
      $region86: #{tpu_custom_call.1} parent=5 // pred_check_branch
        %1146 = sbr.rel (%p1144) target = $region88
      $region87: #{tpu_custom_call.1} parent=5 // pred_region
        %s1147 = ssub.s32 %s25, 2
        // Predicated region
        $region89: #{tpu_custom_call.1} parent=87 // pred_check
          %p1148 = pneg %p237
        $region90: #{tpu_custom_call.1} parent=87 // pred_check_branch
          %1150 = sbr.rel (%p1148) target = $region92
        $region91: #{tpu_custom_call.1} parent=87 // pred_region
          %s1151 = sand.u32 %s222, 1
          %s1152 = scalar_lea.sflag [#allocation5], %s1151
          %s1153 = sand.u32 %s222, 1
          %s1154 = smul.addr %s1153, 8
          %s1155 = scalar_lea.vmem [#allocation15], %s1154
          %1157 = dma.done %s1152, 128
        $region92: #{tpu_custom_call.1} parent=87 // pred_fallthru
          _
      $region88: #{tpu_custom_call.1} parent=5 // pred_fallthru
        _
    $region6: #{tpu_custom_call.1} parent=1 // loop_footer
      %s29 = sadd.s32 1, %s25
    $region7: #{tpu_custom_call.1} parent=1 // loop_footer_branch
      %24 = sbr.rel target = $region3
    $region8: #{tpu_custom_call.1} parent=1 // loop_exit
      _
    %1158 = vsyncpa [#allocation4], 1
    %s1159 = scalar_lea.sflag [#allocation4], 1
    %1160 = vsyncpa %s1159, 1
    %1161 = vsyncpa [#allocation7], 1
    %s1162 = scalar_lea.sflag [#allocation7], 1
    %1163 = vsyncpa %s1162, 1
    %1164 = vsyncpa [#allocation10], 1
    %1165 = vsyncpa [#allocation13], 1
    %1166 = vsyncpa [#allocation5], 1
    %s1167 = scalar_lea.sflag [#allocation5], 1
    %1168 = vsyncpa %s1167, 1

</llo_original>
